<compile_context>
chip_gen: v6e
topology: v6e:2x2x1
jax: 0.10.0
libtpu: 0.0.40
codegen_flags: <defaults>
</compile_context>

<pallas_src>
import math
from functools import partial

import jax
import jax.numpy as jnp
from jax.experimental import pallas as pl
from jax.experimental.pallas import tpu as pltpu

# ---------------- PhariaConfig defaults (decoder-layer relevant) -------------
HIDDEN = 512
INTERMEDIATE = 2048
NUM_HEADS = 4
HEAD_DIM = HIDDEN // NUM_HEADS          # 128
NUM_KV_HEADS = 2
NUM_KV_GROUPS = NUM_HEADS // NUM_KV_HEADS
ROPE_THETA = 1000000.0
LN_EPS = 1e-5

Q_DIM = NUM_HEADS * HEAD_DIM            # 512
KV_DIM = NUM_KV_HEADS * HEAD_DIM        # 256

NEG_INF = -1e30                         # finite "masked" bias (no inf-inf NaNs)


def _pick_tile(n, cap):
    """Largest tile <= cap dividing n that is a multiple of 16; else full n."""
    if n <= cap:
        return n
    for t in range(cap - cap % 16, 15, -16):
        if n % t == 0:
            return t
    return n


# =============================== kernel 1 ====================================
def _ln_qkv_rope_kernel(x_ref, g_ref, b_ref, w_ref, bias_ref, cos_ref, sin_ref,
                        q_ref, k_ref, v_ref, *, eps):
    """LayerNorm(x) @ W_qkv + b, then per-head RoPE on q/k (half layout)."""
    x = x_ref[...].astype(jnp.float32)
    mu = jnp.mean(x, axis=-1, keepdims=True)
    xc = x - mu
    var = jnp.mean(xc * xc, axis=-1, keepdims=True)
    y = xc * jax.lax.rsqrt(var + eps) * g_ref[...] + b_ref[...]
    acc = jnp.dot(y.astype(jnp.bfloat16), w_ref[...],
                  preferred_element_type=jnp.float32) + bias_ref[...]

    cos = cos_ref[...]
    sin = sin_ref[...]          # sign-folded (-sin | +sin), half layout
    D = HEAD_DIM

    def rope(xh):               # (tm, D) f32
        return xh * cos + pltpu.roll(xh, shift=D // 2, axis=1) * sin

    for h in range(NUM_HEADS):
        qh = acc[:, h * D:(h + 1) * D]
        q_ref[:, pl.ds(h * D, D)] = rope(qh).astype(q_ref.dtype)
    for g in range(NUM_KV_HEADS):
        kh = acc[:, Q_DIM + g * D:Q_DIM + (g + 1) * D]
        k_ref[:, pl.ds(g * D, D)] = rope(kh).astype(k_ref.dtype)
    v_ref[...] = acc[:, Q_DIM + KV_DIM:].astype(v_ref.dtype)


def ln_qkv_rope(x, gamma, beta, wqkv_bf, bqkv, cos2d, sin2d, *, eps=LN_EPS):
    M, K = x.shape
    N = wqkv_bf.shape[1]
    tm = _pick_tile(M, 256)
    return pl.pallas_call(
        partial(_ln_qkv_rope_kernel, eps=eps),
        out_shape=(jax.ShapeDtypeStruct((M, Q_DIM), jnp.bfloat16),
                   jax.ShapeDtypeStruct((M, KV_DIM), jnp.bfloat16),
                   jax.ShapeDtypeStruct((M, KV_DIM), jnp.bfloat16)),
        grid=(M // tm,),
        in_specs=[
            pl.BlockSpec((tm, K), lambda i: (i, 0)),        # x rows (tiled)
            pl.BlockSpec((1, K), lambda i: (0, 0)),         # ln gamma (resident)
            pl.BlockSpec((1, K), lambda i: (0, 0)),         # ln beta
            pl.BlockSpec((K, N), lambda i: (0, 0)),         # fused W_qkv (bf16)
            pl.BlockSpec((1, N), lambda i: (0, 0)),         # fused b_qkv
            pl.BlockSpec((tm, HEAD_DIM), lambda i: (i, 0)),  # cos
            pl.BlockSpec((tm, HEAD_DIM), lambda i: (i, 0)),  # sin (signed)
        ],
        out_specs=(pl.BlockSpec((tm, Q_DIM), lambda i: (i, 0)),
                   pl.BlockSpec((tm, KV_DIM), lambda i: (i, 0)),
                   pl.BlockSpec((tm, KV_DIM), lambda i: (i, 0))),
        compiler_params=pltpu.CompilerParams(
            dimension_semantics=("parallel",)),
    )(x, gamma.reshape(1, K), beta.reshape(1, K), wqkv_bf,
      bqkv.reshape(1, N), cos2d, sin2d)


# =============================== kernel 2 ====================================
def _flash_attn_kernel(q_ref, k_ref, v_ref, o_ref, m_sc, l_sc, acc_sc, *,
                       tq, tk, num_heads, num_kv_heads, head_dim):
    """Flash attention step for one (batch, q-tile, kv-tile) grid point.

    q:(tq,H*D) bf16   k/v:(tk,Hkv*D) bf16   o:(tq,H*D) bf16
    Scratch rows are stacked per query head: head h occupies rows
    [h*tq, (h+1)*tq).  Causal mask is generated in-kernel from iota.
    """
    qi = pl.program_id(1)
    ki = pl.program_id(2)
    groups = num_heads // num_kv_heads
    D = head_dim
    q_start = qi * tq
    k_start = ki * tk

    @pl.when(ki == 0)
    def _():
        m_sc[...] = jnp.full(m_sc.shape, NEG_INF, jnp.float32)
        l_sc[...] = jnp.zeros(l_sc.shape, jnp.float32)
        acc_sc[...] = jnp.zeros(acc_sc.shape, jnp.float32)

    # Skip kv blocks that are entirely above the causal diagonal.
    @pl.when(k_start <= q_start + (tq - 1))
    def _():
        row = jax.lax.broadcasted_iota(jnp.int32, (tq, tk), 0) + q_start
        col = jax.lax.broadcasted_iota(jnp.int32, (tq, tk), 1) + k_start
        bias1 = jnp.where(col <= row, 0.0, NEG_INF).astype(jnp.float32)
        bias = jnp.concatenate([bias1] * groups, axis=0)      # (groups*tq, tk)

        q_all = q_ref[...]
        k_all = k_ref[...]
        v_all = v_ref[...]

        for g in range(num_kv_heads):
            kg = k_all[:, g * D:(g + 1) * D]                   # (tk, D) bf16
            vg = v_all[:, g * D:(g + 1) * D]                   # (tk, D) bf16
            # Stack the `groups` query heads sharing this kv head -> one matmul
            # (concat done in f32 for clean sublane layout, then repacked).
            q_stack = jnp.concatenate(
                [q_all[:, (g * groups + r) * D:(g * groups + r + 1) * D]
                     .astype(jnp.float32)
                 for r in range(groups)], axis=0).astype(jnp.bfloat16)
            # scores: (groups*tq, tk); 1/sqrt(D) already folded into q weights
            s = jax.lax.dot_general(q_stack, kg, (((1,), (1,)), ((), ())),
                                    preferred_element_type=jnp.float32)
            s = s + bias

            rows = pl.ds(g * groups * tq, groups * tq)
            m_prev = m_sc[rows, :]
            l_prev = l_sc[rows, :]
            m_new = jnp.maximum(m_prev, jnp.max(s, axis=-1, keepdims=True))
            alpha = jnp.exp(m_prev - m_new)
            p = jnp.exp(s - m_new)
            l_sc[rows, :] = alpha * l_prev + jnp.sum(p, axis=-1, keepdims=True)
            acc_sc[rows, :] = alpha * acc_sc[rows, :] + jnp.dot(
                p.astype(jnp.bfloat16), vg, preferred_element_type=jnp.float32)
            m_sc[rows, :] = m_new

    @pl.when(ki == pl.num_programs(2) - 1)
    def _():
        # per-head, 128-lane-aligned stores (no concatenate of head outputs)
        for h in range(num_heads):
            rows = pl.ds(h * tq, tq)
            inv = pl.reciprocal(l_sc[rows, :], approx=True)
            o_ref[:, pl.ds(h * D, D)] = (acc_sc[rows, :] * inv).astype(o_ref.dtype)


def attention_core(q, k, v):
    """q:(B,S,H*D)  k/v:(B,S,Hkv*D)  (all bf16)  ->  (B,S,H*D) bf16."""
    B, S, QD = q.shape
    KD = k.shape[-1]
    tq = _pick_tile(S, 128)
    tk = _pick_tile(S, 128)
    kernel = partial(_flash_attn_kernel, tq=tq, tk=tk, num_heads=NUM_HEADS,
                     num_kv_heads=NUM_KV_HEADS, head_dim=HEAD_DIM)
    return pl.pallas_call(
        kernel,
        out_shape=jax.ShapeDtypeStruct((B, S, QD), q.dtype),
        grid=(B, S // tq, S // tk),
        in_specs=[
            pl.BlockSpec((None, tq, QD), lambda b, i, j: (b, i, 0)),
            pl.BlockSpec((None, tk, KD), lambda b, i, j: (b, j, 0)),
            pl.BlockSpec((None, tk, KD), lambda b, i, j: (b, j, 0)),
        ],
        out_specs=pl.BlockSpec((None, tq, QD), lambda b, i, j: (b, i, 0)),
        scratch_shapes=[
            pltpu.VMEM((NUM_HEADS * tq, 1), jnp.float32),          # running max
            pltpu.VMEM((NUM_HEADS * tq, 1), jnp.float32),          # running denom
            pltpu.VMEM((NUM_HEADS * tq, HEAD_DIM), jnp.float32),   # accumulator
        ],
        compiler_params=pltpu.CompilerParams(
            dimension_semantics=("parallel", "parallel", "arbitrary")),
    )(q, k, v)


# =============================== kernel 3 ====================================
def _erf_f32(x):
    # Abramowitz & Stegun 7.1.26 polynomial (|err| < 1.5e-7); VPU + EUP exp/recip.
    a1, a2, a3, a4, a5 = (0.254829592, -0.284496736, 1.421413741,
                          -1.453152027, 1.061405429)
    pcoef = 0.3275911
    sgn = jnp.where(x >= 0.0, 1.0, -1.0)
    ax = jnp.abs(x)
    t = pl.reciprocal(1.0 + pcoef * ax, approx=True)
    poly = ((((a5 * t + a4) * t + a3) * t + a2) * t + a1) * t
    return sgn * (1.0 - poly * jnp.exp(-ax * ax))


def _gelu_erf(x):
    return 0.5 * x * (1.0 + _erf_f32(x * 0.7071067811865476))


def _tail_kernel(attn_ref, res_ref, wo_ref, bo_ref, g2_ref, b2_ref,
                 wu_ref, bu_ref, wd_ref, bd_ref, o_ref, *, eps):
    """o_proj + residual + post-attention LayerNorm + GELU MLP + residual."""
    res = res_ref[...].astype(jnp.float32)
    h = jnp.dot(attn_ref[...], wo_ref[...], preferred_element_type=jnp.float32)
    h = h + bo_ref[...] + res
    # post-attention LayerNorm (f32)
    mu = jnp.mean(h, axis=-1, keepdims=True)
    hc = h - mu
    var = jnp.mean(hc * hc, axis=-1, keepdims=True)
    y = hc * jax.lax.rsqrt(var + eps) * g2_ref[...] + b2_ref[...]
    # MLP: down(gelu(up(y)))
    u = jnp.dot(y.astype(jnp.bfloat16), wu_ref[...],
                preferred_element_type=jnp.float32) + bu_ref[...]
    u = _gelu_erf(u)
    mlp = jnp.dot(u.astype(jnp.bfloat16), wd_ref[...],
                  preferred_element_type=jnp.float32) + bd_ref[...]
    o_ref[...] = (h + mlp).astype(o_ref.dtype)


def attn_tail(attn, resid, wo_bf, bo, g2, b2, wu_bf, bu, wd_bf, bd, *, eps=LN_EPS):
    M, K = attn.shape
    N_up = wu_bf.shape[1]
    tm = _pick_tile(M, 256)
    return pl.pallas_call(
        partial(_tail_kernel, eps=eps),
        out_shape=jax.ShapeDtypeStruct((M, K), resid.dtype),
        grid=(M // tm,),
        in_specs=[
            pl.BlockSpec((tm, K), lambda i: (i, 0)),        # attn rows (tiled)
            pl.BlockSpec((tm, K), lambda i: (i, 0)),        # residual rows
            pl.BlockSpec((K, K), lambda i: (0, 0)),         # wo (bf16, resident)
            pl.BlockSpec((1, K), lambda i: (0, 0)),
            pl.BlockSpec((1, K), lambda i: (0, 0)),
            pl.BlockSpec((1, K), lambda i: (0, 0)),
            pl.BlockSpec((K, N_up), lambda i: (0, 0)),      # wup (bf16, resident)
            pl.BlockSpec((1, N_up), lambda i: (0, 0)),
            pl.BlockSpec((N_up, K), lambda i: (0, 0)),      # wdown (bf16, resident)
            pl.BlockSpec((1, K), lambda i: (0, 0)),
        ],
        out_specs=pl.BlockSpec((tm, K), lambda i: (i, 0)),
        compiler_params=pltpu.CompilerParams(
            dimension_semantics=("parallel",),
            # bf16 weights ~4.5 MiB resident (x2 buffering) + activation tiles:
            # comfortably under v7x's 64 MiB physical VMEM.
            vmem_limit_bytes=28 * 1024 * 1024),
    )(attn, resid, wo_bf, bo.reshape(1, K), g2.reshape(1, K), b2.reshape(1, K),
      wu_bf, bu.reshape(1, N_up), wd_bf, bd.reshape(1, K))


# ------------------------- trace-time weight prep ----------------------------
def _interleave_to_half_perm(num_heads, head_dim):
    """Per-head column permutation: [0,2,...,D-2, 1,3,...,D-1]."""
    perm = jnp.concatenate([jnp.arange(0, head_dim, 2, dtype=jnp.int32),
                            jnp.arange(1, head_dim, 2, dtype=jnp.int32)])
    offs = (jnp.arange(num_heads, dtype=jnp.int32) * head_dim)[:, None]
    return (offs + perm[None, :]).reshape(-1)


def prepare_params(params):
    """Fuse wq|wk|wv (RoPE half-layout permutation on q/k, 1/sqrt(D) folded
    into q), cast matmul weights to bf16."""
    qperm = _interleave_to_half_perm(NUM_HEADS, HEAD_DIM)
    kperm = _interleave_to_half_perm(NUM_KV_HEADS, HEAD_DIM)
    scale = 1.0 / math.sqrt(HEAD_DIM)
    wq = params['wq'][:, qperm] * scale
    bq = params['bq'][qperm] * scale
    wqkv = jnp.concatenate([wq, params['wk'][:, kperm], params['wv']], axis=1)
    bqkv = jnp.concatenate([bq, params['bk'][kperm], params['bv']])
    prep = dict(params)
    prep['wqkv_bf'] = wqkv.astype(jnp.bfloat16)
    prep['bqkv'] = bqkv.astype(jnp.float32)
    prep['wo_bf'] = params['wo'].astype(jnp.bfloat16)
    prep['wup_bf'] = params['wup'].astype(jnp.bfloat16)
    prep['wdown_bf'] = params['wdown'].astype(jnp.bfloat16)
    return prep


def rope_tables_half(position_ids, head_dim, base):
    """cos / sign-folded sin tables in the half (de-interleaved) layout."""
    inv_freq = 1.0 / (base ** (jnp.arange(0, head_dim, 2, dtype=jnp.float32)
                               / head_dim))
    freqs = position_ids.astype(jnp.float32)[..., None] * inv_freq   # (B,S,D/2)
    cos = jnp.cos(jnp.concatenate([freqs, freqs], axis=-1))
    sinf = jnp.sin(freqs)
    sin_signed = jnp.concatenate([-sinf, sinf], axis=-1)
    return cos.astype(jnp.float32), sin_signed.astype(jnp.float32)


# ------------------------------ full forward ---------------------------------
def pharia_decoder_layer_forward(prep, hidden_states, attention_mask, position_ids):
    # TODO(synk): only the standard causal mask is supported (regenerated
    # in-kernel); use_cache / output_attentions / attention dropout (p=0.0)
    # are not implemented.
    del attention_mask
    B, S, _ = hidden_states.shape
    M = B * S
    x2d = hidden_states.reshape(M, HIDDEN)                   # residual (pre-LN)

    # (1) LN1 + fused QKV projection + RoPE, three separate bf16 outputs
    cos, sin_signed = rope_tables_half(position_ids, HEAD_DIM, ROPE_THETA)
    q2d, k2d, v2d = ln_qkv_rope(x2d, prep['ln1_g'], prep['ln1_b'],
                                prep['wqkv_bf'], prep['bqkv'],
                                cos.reshape(M, HEAD_DIM),
                                sin_signed.reshape(M, HEAD_DIM))

    # (2) flash attention with in-kernel causal mask and GQA (no kv repeat)
    attn = attention_core(q2d.reshape(B, S, Q_DIM),
                          k2d.reshape(B, S, KV_DIM),
                          v2d.reshape(B, S, KV_DIM))         # (B, S, H*D) bf16

    # (3) o-proj + residual + LN2 + GELU MLP + residual
    out = attn_tail(attn.reshape(M, HIDDEN), x2d,
                    prep['wo_bf'], prep['bo'], prep['ln2_g'], prep['ln2_b'],
                    prep['wup_bf'], prep['bup'], prep['wdown_bf'], prep['bdown'])
    return out.reshape(B, S, HIDDEN)


# --------------------------- pure-JAX reference ------------------------------
def _layernorm_ref(x, g, b, eps=LN_EPS):
    mu = jnp.mean(x, axis=-1, keepdims=True)
    var = jnp.mean((x - mu) ** 2, axis=-1, keepdims=True)
    return (x - mu) / jnp.sqrt(var + eps) * g + b


def _rotary_cos_sin_interleaved(position_ids, head_dim, base, dtype):
    inv_freq = 1.0 / (base ** (jnp.arange(0, head_dim, 2, dtype=jnp.float32)
                               / head_dim))
    freqs = position_ids.astype(jnp.float32)[..., None] * inv_freq
    emb = jnp.repeat(freqs, 2, axis=-1)
    return jnp.cos(emb).astype(dtype), jnp.sin(emb).astype(dtype)


def _rotate_half_interleaved(x):
    x_even = x[..., ::2]
    x_odd = x[..., 1::2]
    return jnp.stack([-x_odd, x_even], axis=-1).reshape(x.shape)


def reference_forward(params, hidden_states, attention_mask, position_ids):
    B, S, _ = hidden_states.shape
    resid = hidden_states
    h = _layernorm_ref(hidden_states, params['ln1_g'], params['ln1_b'])
    x2d = h.reshape(B * S, HIDDEN)
    q = (x2d @ params['wq'] + params['bq']).reshape(B, S, NUM_HEADS, HEAD_DIM).transpose(0, 2, 1, 3)
    k = (x2d @ params['wk'] + params['bk']).reshape(B, S, NUM_KV_HEADS, HEAD_DIM).transpose(0, 2, 1, 3)
    v = (x2d @ params['wv'] + params['bv']).reshape(B, S, NUM_KV_HEADS, HEAD_DIM).transpose(0, 2, 1, 3)
    cos, sin = _rotary_cos_sin_interleaved(position_ids, HEAD_DIM, ROPE_THETA, h.dtype)
    cos_, sin_ = cos[:, None], sin[:, None]
    q = q * cos_ + _rotate_half_interleaved(q) * sin_
    k = k * cos_ + _rotate_half_interleaved(k) * sin_
    k = jnp.repeat(k, NUM_KV_GROUPS, axis=1)
    v = jnp.repeat(v, NUM_KV_GROUPS, axis=1)
    s = jnp.einsum('bhqd,bhkd->bhqk', q, k) / math.sqrt(HEAD_DIM) + attention_mask
    p = jax.nn.softmax(s.astype(jnp.float32), axis=-1).astype(q.dtype)
    o = jnp.einsum('bhqk,bhkd->bhqd', p, v)
    o = o.transpose(0, 2, 1, 3).reshape(B * S, HIDDEN)
    attn_out = (o @ params['wo'] + params['bo']).reshape(B, S, HIDDEN)
    h1 = resid + attn_out
    y = _layernorm_ref(h1, params['ln2_g'], params['ln2_b']).reshape(B * S, HIDDEN)
    u = jax.nn.gelu(y @ params['wup'] + params['bup'], approximate=False)
    mlp = (u @ params['wdown'] + params['bdown']).reshape(B, S, HIDDEN)
    return h1 + mlp


# ---------------------------------- main --------------------------------------
if __name__ == "__main__":
    B, S = 2, 8
    key = jax.random.PRNGKey(0)
    ks = jax.random.split(key, 18)

    hidden_states = jax.random.normal(ks[0], (B, S, HIDDEN), jnp.float32)
    params = dict(
        wq=0.02 * jax.random.normal(ks[1], (HIDDEN, Q_DIM), jnp.float32),
        wk=0.02 * jax.random.normal(ks[2], (HIDDEN, KV_DIM), jnp.float32),
        wv=0.02 * jax.random.normal(ks[3], (HIDDEN, KV_DIM), jnp.float32),
        wo=0.02 * jax.random.normal(ks[4], (HIDDEN, HIDDEN), jnp.float32),
        bq=0.02 * jax.random.normal(ks[5], (Q_DIM,), jnp.float32),
        bk=0.02 * jax.random.normal(ks[6], (KV_DIM,), jnp.float32),
        bv=0.02 * jax.random.normal(ks[7], (KV_DIM,), jnp.float32),
        bo=0.02 * jax.random.normal(ks[8], (HIDDEN,), jnp.float32),
        wup=0.02 * jax.random.normal(ks[9], (HIDDEN, INTERMEDIATE), jnp.float32),
        bup=0.02 * jax.random.normal(ks[10], (INTERMEDIATE,), jnp.float32),
        wdown=0.02 * jax.random.normal(ks[11], (INTERMEDIATE, HIDDEN), jnp.float32),
        bdown=0.02 * jax.random.normal(ks[12], (HIDDEN,), jnp.float32),
        ln1_g=1.0 + 0.1 * jax.random.normal(ks[13], (HIDDEN,), jnp.float32),
        ln1_b=0.1 * jax.random.normal(ks[14], (HIDDEN,), jnp.float32),
        ln2_g=1.0 + 0.1 * jax.random.normal(ks[15], (HIDDEN,), jnp.float32),
        ln2_b=0.1 * jax.random.normal(ks[16], (HIDDEN,), jnp.float32),
    )

    position_ids = jnp.broadcast_to(jnp.arange(S, dtype=jnp.int32)[None, :], (B, S))

    # Standard additive causal mask (B, 1, S, S) for the reference path.
    causal = jnp.tril(jnp.ones((S, S), dtype=bool))
    attention_mask = jnp.where(causal, 0.0, -1e9).astype(jnp.float32)[None, None]
    attention_mask = jnp.broadcast_to(attention_mask, (B, 1, S, S))

    prep = prepare_params(params)
    out = pharia_decoder_layer_forward(prep, hidden_states, attention_mask, position_ids)
    out = jax.block_until_ready(out)

    ref = jax.block_until_ready(
        reference_forward(params, hidden_states, attention_mask, position_ids))

    assert out.shape == (B, S, HIDDEN), out.shape
    max_err = float(jnp.max(jnp.abs(out - ref)))
    # bf16 MXU operands with f32 accumulation: a few 1e-3 absolute error expected.
    assert max_err < 3e-2, f"mismatch vs reference: max abs err {max_err}"

    print("KERNEL_OK")
</pallas_src>

<mosaic_0001>
module attributes {stable_mosaic.version = 11 : i64} {
  func.func @_ln_qkv_rope_kernel(%arg0: i32, %arg1: memref<16x512xf32, #tpu.memory_space<vmem>>, %arg2: memref<1x512xf32, #tpu.memory_space<vmem>>, %arg3: memref<1x512xf32, #tpu.memory_space<vmem>>, %arg4: memref<512x1024xbf16, #tpu.memory_space<vmem>>, %arg5: memref<1x1024xf32, #tpu.memory_space<vmem>>, %arg6: memref<16x128xf32, #tpu.memory_space<vmem>>, %arg7: memref<16x128xf32, #tpu.memory_space<vmem>>, %arg8: memref<16x512xbf16, #tpu.memory_space<vmem>>, %arg9: memref<16x256xbf16, #tpu.memory_space<vmem>>, %arg10: memref<16x256xbf16, #tpu.memory_space<vmem>>) attributes {dimension_semantics = [#tpu.dimension_semantics<parallel>], iteration_bounds = array<i64: 1>, scalar_prefetch = 0 : i64, scratch_operands = 0 : i64, tpu.core_type = #tpu.core_type<tc>, window_params = [{transform_indices = @transform_0, window_bounds = array<i64: 16, 512>}, {pipeline_mode = #tpu.pipeline_mode<synchronous>, transform_indices = @transform_1, window_bounds = array<i64: 1, 512>}, {pipeline_mode = #tpu.pipeline_mode<synchronous>, transform_indices = @transform_2, window_bounds = array<i64: 1, 512>}, {pipeline_mode = #tpu.pipeline_mode<synchronous>, transform_indices = @transform_3, window_bounds = array<i64: 512, 1024>}, {pipeline_mode = #tpu.pipeline_mode<synchronous>, transform_indices = @transform_4, window_bounds = array<i64: 1, 1024>}, {transform_indices = @transform_5, window_bounds = array<i64: 16, 128>}, {transform_indices = @transform_6, window_bounds = array<i64: 16, 128>}, {transform_indices = @transform_7, window_bounds = array<i64: 16, 512>}, {transform_indices = @transform_8, window_bounds = array<i64: 16, 256>}, {transform_indices = @transform_9, window_bounds = array<i64: 16, 256>}]} {
    %c0 = arith.constant 0 : index
    %c0_0 = arith.constant 0 : index
    %0 = vector.load %arg1[%c0, %c0_0] : memref<16x512xf32, #tpu.memory_space<vmem>>, vector<16x512xf32>
    %cst = arith.constant dense<0.000000e+00> : vector<16xf32>
    %1 = vector.multi_reduction <add>, %0, %cst [1] : vector<16x512xf32> to vector<16xf32>
    %2 = vector.shape_cast %1 : vector<16xf32> to vector<16x1xf32>
    %cst_1 = arith.constant 5.120000e+02 : f32
    %3 = vector.broadcast %cst_1 : f32 to vector<16x1xf32>
    %4 = arith.divf %2, %3 : vector<16x1xf32>
    %5 = vector.broadcast %4 : vector<16x1xf32> to vector<16x512xf32>
    %6 = arith.subf %0, %5 : vector<16x512xf32>
    %7 = arith.mulf %6, %6 : vector<16x512xf32>
    %cst_2 = arith.constant dense<0.000000e+00> : vector<16xf32>
    %8 = vector.multi_reduction <add>, %7, %cst_2 [1] : vector<16x512xf32> to vector<16xf32>
    %9 = vector.shape_cast %8 : vector<16xf32> to vector<16x1xf32>
    %cst_3 = arith.constant 5.120000e+02 : f32
    %10 = vector.broadcast %cst_3 : f32 to vector<16x1xf32>
    %11 = arith.divf %9, %10 : vector<16x1xf32>
    %cst_4 = arith.constant 9.99999974E-6 : f32
    %12 = vector.broadcast %cst_4 : f32 to vector<16x1xf32>
    %13 = arith.addf %11, %12 : vector<16x1xf32>
    %14 = math.rsqrt %13 : vector<16x1xf32>
    %15 = vector.broadcast %14 : vector<16x1xf32> to vector<16x512xf32>
    %16 = arith.mulf %6, %15 : vector<16x512xf32>
    %c0_5 = arith.constant 0 : index
    %c0_6 = arith.constant 0 : index
    %17 = vector.load %arg2[%c0_5, %c0_6] : memref<1x512xf32, #tpu.memory_space<vmem>>, vector<1x512xf32>
    %18 = vector.broadcast %17 : vector<1x512xf32> to vector<16x512xf32>
    %19 = arith.mulf %16, %18 : vector<16x512xf32>
    %c0_7 = arith.constant 0 : index
    %c0_8 = arith.constant 0 : index
    %20 = vector.load %arg3[%c0_7, %c0_8] : memref<1x512xf32, #tpu.memory_space<vmem>>, vector<1x512xf32>
    %21 = vector.broadcast %20 : vector<1x512xf32> to vector<16x512xf32>
    %22 = arith.addf %19, %21 : vector<16x512xf32>
    %23 = arith.truncf %22 : vector<16x512xf32> to vector<16x512xbf16>
    %c0_9 = arith.constant 0 : index
    %c0_10 = arith.constant 0 : index
    %24 = vector.load %arg4[%c0_9, %c0_10] : memref<512x1024xbf16, #tpu.memory_space<vmem>>, vector<512x1024xbf16>
    %cst_11 = arith.constant dense<0.000000e+00> : vector<16x1024xf32>
    %25 = tpu.matmul %23, %24, %cst_11 {dimension_numbers = #tpu.dot_dimension_numbers<[1], [0], [0], [1], [0, 0, 1, 1], [], []>} : vector<16x512xbf16>, vector<512x1024xbf16>, vector<16x1024xf32> -> vector<16x1024xf32>
    %c0_12 = arith.constant 0 : index
    %c0_13 = arith.constant 0 : index
    %26 = vector.load %arg5[%c0_12, %c0_13] : memref<1x1024xf32, #tpu.memory_space<vmem>>, vector<1x1024xf32>
    %27 = vector.broadcast %26 : vector<1x1024xf32> to vector<16x1024xf32>
    %28 = arith.addf %25, %27 : vector<16x1024xf32>
    %c0_14 = arith.constant 0 : index
    %c0_15 = arith.constant 0 : index
    %29 = vector.load %arg6[%c0_14, %c0_15] : memref<16x128xf32, #tpu.memory_space<vmem>>, vector<16x128xf32>
    %c0_16 = arith.constant 0 : index
    %c0_17 = arith.constant 0 : index
    %30 = vector.load %arg7[%c0_16, %c0_17] : memref<16x128xf32, #tpu.memory_space<vmem>>, vector<16x128xf32>
    %31 = vector.extract_strided_slice %28 {offsets = [0, 0], sizes = [16, 128], strides = [1, 1]} : vector<16x1024xf32> to vector<16x128xf32>
    %32 = arith.mulf %31, %29 : vector<16x128xf32>
    %c64_i32 = arith.constant 64 : i32
    %33 = tpu.dynamic_rotate %31 by %c64_i32 dim 1 : vector<16x128xf32>, i32 -> vector<16x128xf32>
    %34 = arith.mulf %33, %30 : vector<16x128xf32>
    %35 = arith.addf %32, %34 : vector<16x128xf32>
    %36 = arith.truncf %35 : vector<16x128xf32> to vector<16x128xbf16>
    %c0_18 = arith.constant 0 : index
    %c0_19 = arith.constant 0 : index
    %37 = vector.load %arg8[%c0_18, %c0_19] : memref<16x512xbf16, #tpu.memory_space<vmem>>, vector<16x128xbf16>
    tpu.vector_store %arg8[%c0_18, %c0_19], %36 {strides = array<i32>} : memref<16x512xbf16, #tpu.memory_space<vmem>>, vector<16x128xbf16>,
    %38 = vector.extract_strided_slice %28 {offsets = [0, 128], sizes = [16, 128], strides = [1, 1]} : vector<16x1024xf32> to vector<16x128xf32>
    %39 = arith.mulf %38, %29 : vector<16x128xf32>
    %c64_i32_20 = arith.constant 64 : i32
    %40 = tpu.dynamic_rotate %38 by %c64_i32_20 dim 1 : vector<16x128xf32>, i32 -> vector<16x128xf32>
    %41 = arith.mulf %40, %30 : vector<16x128xf32>
    %42 = arith.addf %39, %41 : vector<16x128xf32>
    %43 = arith.truncf %42 : vector<16x128xf32> to vector<16x128xbf16>
    %c0_21 = arith.constant 0 : index
    %c128 = arith.constant 128 : index
    %44 = vector.load %arg8[%c0_21, %c128] : memref<16x512xbf16, #tpu.memory_space<vmem>>, vector<16x128xbf16>
    tpu.vector_store %arg8[%c0_21, %c128], %43 {strides = array<i32>} : memref<16x512xbf16, #tpu.memory_space<vmem>>, vector<16x128xbf16>,
    %45 = vector.extract_strided_slice %28 {offsets = [0, 256], sizes = [16, 128], strides = [1, 1]} : vector<16x1024xf32> to vector<16x128xf32>
    %46 = arith.mulf %45, %29 : vector<16x128xf32>
    %c64_i32_22 = arith.constant 64 : i32
    %47 = tpu.dynamic_rotate %45 by %c64_i32_22 dim 1 : vector<16x128xf32>, i32 -> vector<16x128xf32>
    %48 = arith.mulf %47, %30 : vector<16x128xf32>
    %49 = arith.addf %46, %48 : vector<16x128xf32>
    %50 = arith.truncf %49 : vector<16x128xf32> to vector<16x128xbf16>
    %c0_23 = arith.constant 0 : index
    %c256 = arith.constant 256 : index
    %51 = vector.load %arg8[%c0_23, %c256] : memref<16x512xbf16, #tpu.memory_space<vmem>>, vector<16x128xbf16>
    tpu.vector_store %arg8[%c0_23, %c256], %50 {strides = array<i32>} : memref<16x512xbf16, #tpu.memory_space<vmem>>, vector<16x128xbf16>,
    %52 = vector.extract_strided_slice %28 {offsets = [0, 384], sizes = [16, 128], strides = [1, 1]} : vector<16x1024xf32> to vector<16x128xf32>
    %53 = arith.mulf %52, %29 : vector<16x128xf32>
    %c64_i32_24 = arith.constant 64 : i32
    %54 = tpu.dynamic_rotate %52 by %c64_i32_24 dim 1 : vector<16x128xf32>, i32 -> vector<16x128xf32>
    %55 = arith.mulf %54, %30 : vector<16x128xf32>
    %56 = arith.addf %53, %55 : vector<16x128xf32>
    %57 = arith.truncf %56 : vector<16x128xf32> to vector<16x128xbf16>
    %c0_25 = arith.constant 0 : index
    %c384 = arith.constant 384 : index
    %58 = vector.load %arg8[%c0_25, %c384] : memref<16x512xbf16, #tpu.memory_space<vmem>>, vector<16x128xbf16>
    tpu.vector_store %arg8[%c0_25, %c384], %57 {strides = array<i32>} : memref<16x512xbf16, #tpu.memory_space<vmem>>, vector<16x128xbf16>,
    %59 = vector.extract_strided_slice %28 {offsets = [0, 512], sizes = [16, 128], strides = [1, 1]} : vector<16x1024xf32> to vector<16x128xf32>
    %60 = arith.mulf %59, %29 : vector<16x128xf32>
    %c64_i32_26 = arith.constant 64 : i32
    %61 = tpu.dynamic_rotate %59 by %c64_i32_26 dim 1 : vector<16x128xf32>, i32 -> vector<16x128xf32>
    %62 = arith.mulf %61, %30 : vector<16x128xf32>
    %63 = arith.addf %60, %62 : vector<16x128xf32>
    %64 = arith.truncf %63 : vector<16x128xf32> to vector<16x128xbf16>
    %c0_27 = arith.constant 0 : index
    %c0_28 = arith.constant 0 : index
    %65 = vector.load %arg9[%c0_27, %c0_28] : memref<16x256xbf16, #tpu.memory_space<vmem>>, vector<16x128xbf16>
    tpu.vector_store %arg9[%c0_27, %c0_28], %64 {strides = array<i32>} : memref<16x256xbf16, #tpu.memory_space<vmem>>, vector<16x128xbf16>,
    %66 = vector.extract_strided_slice %28 {offsets = [0, 640], sizes = [16, 128], strides = [1, 1]} : vector<16x1024xf32> to vector<16x128xf32>
    %67 = arith.mulf %66, %29 : vector<16x128xf32>
    %c64_i32_29 = arith.constant 64 : i32
    %68 = tpu.dynamic_rotate %66 by %c64_i32_29 dim 1 : vector<16x128xf32>, i32 -> vector<16x128xf32>
    %69 = arith.mulf %68, %30 : vector<16x128xf32>
    %70 = arith.addf %67, %69 : vector<16x128xf32>
    %71 = arith.truncf %70 : vector<16x128xf32> to vector<16x128xbf16>
    %c0_30 = arith.constant 0 : index
    %c128_31 = arith.constant 128 : index
    %72 = vector.load %arg9[%c0_30, %c128_31] : memref<16x256xbf16, #tpu.memory_space<vmem>>, vector<16x128xbf16>
    tpu.vector_store %arg9[%c0_30, %c128_31], %71 {strides = array<i32>} : memref<16x256xbf16, #tpu.memory_space<vmem>>, vector<16x128xbf16>,
    %73 = vector.extract_strided_slice %28 {offsets = [0, 768], sizes = [16, 256], strides = [1, 1]} : vector<16x1024xf32> to vector<16x256xf32>
    %74 = arith.truncf %73 : vector<16x256xf32> to vector<16x256xbf16>
    %c0_32 = arith.constant 0 : index
    %c0_33 = arith.constant 0 : index
    %75 = vector.load %arg10[%c0_32, %c0_33] : memref<16x256xbf16, #tpu.memory_space<vmem>>, vector<16x256xbf16>
    tpu.vector_store %arg10[%c0_32, %c0_33], %74 {strides = array<i32>} : memref<16x256xbf16, #tpu.memory_space<vmem>>, vector<16x256xbf16>,
    return
  }
  func.func @transform_0(%arg0: i32) -> (i32, i32) {
    %c0_i32 = arith.constant 0 : i32
    %c0_i32_0 = arith.constant 0 : i32
    return %arg0, %c0_i32 : i32, i32
  }
  func.func @transform_1(%arg0: i32) -> (i32, i32) {
    %c0_i32 = arith.constant 0 : i32
    %c0_i32_0 = arith.constant 0 : i32
    %c0_i32_1 = arith.constant 0 : i32
    return %c0_i32, %c0_i32_0 : i32, i32
  }
  func.func @transform_2(%arg0: i32) -> (i32, i32) {
    %c0_i32 = arith.constant 0 : i32
    %c0_i32_0 = arith.constant 0 : i32
    %c0_i32_1 = arith.constant 0 : i32
    return %c0_i32, %c0_i32_0 : i32, i32
  }
  func.func @transform_3(%arg0: i32) -> (i32, i32) {
    %c0_i32 = arith.constant 0 : i32
    %c0_i32_0 = arith.constant 0 : i32
    %c0_i32_1 = arith.constant 0 : i32
    return %c0_i32, %c0_i32_0 : i32, i32
  }
  func.func @transform_4(%arg0: i32) -> (i32, i32) {
    %c0_i32 = arith.constant 0 : i32
    %c0_i32_0 = arith.constant 0 : i32
    %c0_i32_1 = arith.constant 0 : i32
    return %c0_i32, %c0_i32_0 : i32, i32
  }
  func.func @transform_5(%arg0: i32) -> (i32, i32) {
    %c0_i32 = arith.constant 0 : i32
    %c0_i32_0 = arith.constant 0 : i32
    return %arg0, %c0_i32 : i32, i32
  }
  func.func @transform_6(%arg0: i32) -> (i32, i32) {
    %c0_i32 = arith.constant 0 : i32
    %c0_i32_0 = arith.constant 0 : i32
    return %arg0, %c0_i32 : i32, i32
  }
  func.func @transform_7(%arg0: i32) -> (i32, i32) {
    %c0_i32 = arith.constant 0 : i32
    %c0_i32_0 = arith.constant 0 : i32
    return %arg0, %c0_i32 : i32, i32
  }
  func.func @transform_8(%arg0: i32) -> (i32, i32) {
    %c0_i32 = arith.constant 0 : i32
    %c0_i32_0 = arith.constant 0 : i32
    return %arg0, %c0_i32 : i32, i32
  }
  func.func @transform_9(%arg0: i32) -> (i32, i32) {
    %c0_i32 = arith.constant 0 : i32
    %c0_i32_0 = arith.constant 0 : i32
    return %arg0, %c0_i32 : i32, i32
  }
}

</mosaic_0001>

<llo_original>
// kernel: tpu_custom_call.1
$region0: #{tpu_custom_call.1}
  #allocation0 [shape = 'u32[]', space=smem, size = 0x4, offset = 0x4, fixed_abs, tag = 'smem constant byte address 0x4 - core index']
  #allocation1 [shape = 'u32[144,128]{1,0:T(1,128)}', space=vmem, size = 0x12000, scoped, tag = 'internal scratch']
  %s0 = inlined_call_operand.hbm [shape: f32[16,512], index: 0, kind: input, shape index: {}]
  %s1 = inlined_call_operand.hbm [shape: f32[1,512], index: 1, kind: input, shape index: {}]
  %s2 = inlined_call_operand.hbm [shape: f32[1,512], index: 2, kind: input, shape index: {}]
  %s3 = inlined_call_operand.hbm [shape: bf16[512,1024], index: 3, kind: input, shape index: {}]
  %s4 = inlined_call_operand.hbm [shape: f32[1,1024], index: 4, kind: input, shape index: {}]
  %s5 = inlined_call_operand.hbm [shape: f32[16,128], index: 5, kind: input, shape index: {}]
  %s6 = inlined_call_operand.hbm [shape: f32[16,128], index: 6, kind: input, shape index: {}]
  %s7 = inlined_call_operand.hbm [shape: bf16[16,512], index: 7, kind: output, shape index: {0}]
  %s8 = inlined_call_operand.hbm [shape: bf16[16,256], index: 8, kind: output, shape index: {1}]
  %s9 = inlined_call_operand.hbm [shape: bf16[16,256], index: 9, kind: output, shape index: {2}]
  %10 = xla_tuple %s7, %s8, %s9
  %s11 = sld [smem:[#allocation0]]
  $region82: #{tpu_custom_call.1} parent=0
    _
  %s13 = ssub.s32 1, %s11
  %s14 = scalar_select 0, %s13, %s11
  $region1: #{tpu_custom_call.1} parent=0
    #allocation2 [shape = 'u8[32768]{0}', space=vmem, size = 0x8000, scoped, tag = 'input window, operand 0, single buffered']
    #allocation3 [shape = 's32[1]{0}', space=sflag, size = 0x4, scoped, tag = 'scoped memory for tpu_custom_call.1']
    #allocation4 [shape = 's32[1]{0}', space=sflag, size = 0x4, scoped, tag = 'scoped memory for tpu_custom_call.1']
    #allocation5 [shape = 'u8[2048]{0}', space=vmem, size = 0x800, scoped, tag = 'input window, operand 1, single buffered']
    #allocation6 [shape = 's32[1]{0}', space=sflag, size = 0x4, scoped, tag = 'scoped memory for tpu_custom_call.1']
    #allocation7 [shape = 'u8[2048]{0}', space=vmem, size = 0x800, scoped, tag = 'input window, operand 2, single buffered']
    #allocation8 [shape = 'u8[1048576]{0}', space=vmem, size = 0x100000, scoped, tag = 'input window, operand 3, single buffered']
    #allocation9 [shape = 's32[1]{0}', space=sflag, size = 0x4, scoped, tag = 'scoped memory for tpu_custom_call.1']
    #allocation10 [shape = 'u8[4096]{0}', space=vmem, size = 0x1000, scoped, tag = 'input window, operand 4, single buffered']
    #allocation11 [shape = 'u8[8192]{0}', space=vmem, size = 0x2000, scoped, tag = 'input window, operand 5, single buffered']
    #allocation12 [shape = 's32[1]{0}', space=sflag, size = 0x4, scoped, tag = 'scoped memory for tpu_custom_call.1']
    #allocation13 [shape = 'u8[8192]{0}', space=vmem, size = 0x2000, scoped, tag = 'input window, operand 6, single buffered']
    #allocation14 [shape = 'u8[16384]{0}', space=vmem, size = 0x4000, scoped, tag = 'output window, operand 0, single buffered']
    #allocation15 [shape = 'u8[8192]{0}', space=vmem, size = 0x2000, scoped, tag = 'output window, operand 1, single buffered']
    #allocation16 [shape = 's32[1]{0}', space=sflag, size = 0x4, scoped, tag = 'scoped memory for tpu_custom_call.1']
    #allocation17 [shape = 'u8[8192]{0}', space=vmem, size = 0x2000, scoped, tag = 'output window, operand 2, single buffered']
    %15 = vsyncpa [#allocation3], 0
    %16 = vsyncpa [#allocation6], 0
    %17 = vsyncpa [#allocation9], 0
    %18 = vsyncpa [#allocation12], 0
    %19 = vsyncpa [#allocation4], 0
    %20 = vsyncpa [#allocation16], 0
    // Predicated region
    $region2: #{tpu_custom_call.1} parent=1 // pred_check
      _
    $region3: #{tpu_custom_call.1} parent=1 // pred_check_branch
      %22 = sbr.rel (0) target = $region5
    $region4: #{tpu_custom_call.1} parent=1 // pred_region
      %s24 = ssub.s32 1024, 1024
      %25 = vsyncadd [#allocation3], %s24
      %s26 = sshll.u32 [#allocation2], 4
      %s27 = int_to_ptr.vmem [resolvable:$true] %s26
      %32 = dma.hbm_to_vmem [thread:$0]  %s0, 1024, %s27, [#allocation3], 512, 512, 32
    $region5: #{tpu_custom_call.1} parent=1 // pred_fallthru
      _
    // Predicated region
    $region6: #{tpu_custom_call.1} parent=1 // pred_check
      _
    $region7: #{tpu_custom_call.1} parent=1 // pred_check_branch
      %34 = sbr.rel (0) target = $region9
    $region8: #{tpu_custom_call.1} parent=1 // pred_region
      %s36 = ssub.s32 64, 64
      %37 = vsyncadd [#allocation6], %s36
      %s39 = sshll.u32 [#allocation5], 4
      %s40 = int_to_ptr.vmem [resolvable:$true] %s39
      %42 = dma.hbm_to_vmem [thread:$0]  %s1, 64, %s40, [#allocation6]
    $region9: #{tpu_custom_call.1} parent=1 // pred_fallthru
      _
    // Predicated region
    $region10: #{tpu_custom_call.1} parent=1 // pred_check
      _
    $region11: #{tpu_custom_call.1} parent=1 // pred_check_branch
      %44 = sbr.rel (0) target = $region13
    $region12: #{tpu_custom_call.1} parent=1 // pred_region
      %s46 = ssub.s32 64, 64
      %47 = vsyncadd [#allocation6], %s46
      %s49 = sshll.u32 [#allocation7], 4
      %s50 = int_to_ptr.vmem [resolvable:$true] %s49
      %52 = dma.hbm_to_vmem [thread:$0]  %s2, 64, %s50, [#allocation6]
    $region13: #{tpu_custom_call.1} parent=1 // pred_fallthru
      _
    // Predicated region
    $region14: #{tpu_custom_call.1} parent=1 // pred_check
      _
    $region15: #{tpu_custom_call.1} parent=1 // pred_check_branch
      %54 = sbr.rel (0) target = $region17
    $region16: #{tpu_custom_call.1} parent=1 // pred_region
      %s56 = ssub.s32 32768, 32768
      %57 = vsyncadd [#allocation9], %s56
      %s58 = sshll.u32 [#allocation8], 4
      %s59 = int_to_ptr.vmem [resolvable:$true] %s58
      %64 = dma.hbm_to_vmem [thread:$0]  %s3, 32768, %s59, [#allocation9], 512, 512, 32
    $region17: #{tpu_custom_call.1} parent=1 // pred_fallthru
      _
    // Predicated region
    $region18: #{tpu_custom_call.1} parent=1 // pred_check
      _
    $region19: #{tpu_custom_call.1} parent=1 // pred_check_branch
      %66 = sbr.rel (0) target = $region21
    $region20: #{tpu_custom_call.1} parent=1 // pred_region
      %s68 = ssub.s32 128, 128
      %69 = vsyncadd [#allocation9], %s68
      %s71 = sshll.u32 [#allocation10], 4
      %s72 = int_to_ptr.vmem [resolvable:$true] %s71
      %74 = dma.hbm_to_vmem [thread:$0]  %s4, 128, %s72, [#allocation9]
    $region21: #{tpu_custom_call.1} parent=1 // pred_fallthru
      _
    // Predicated region
    $region22: #{tpu_custom_call.1} parent=1 // pred_check
      _
    $region23: #{tpu_custom_call.1} parent=1 // pred_check_branch
      %76 = sbr.rel (0) target = $region25
    $region24: #{tpu_custom_call.1} parent=1 // pred_region
      %s78 = ssub.s32 256, 256
      %79 = vsyncadd [#allocation12], %s78
      %s80 = sshll.u32 [#allocation11], 4
      %s81 = int_to_ptr.vmem [resolvable:$true] %s80
      %86 = dma.hbm_to_vmem [thread:$0]  %s5, 256, %s81, [#allocation12], 128, 128, 8
    $region25: #{tpu_custom_call.1} parent=1 // pred_fallthru
      _
    // Predicated region
    $region26: #{tpu_custom_call.1} parent=1 // pred_check
      _
    $region27: #{tpu_custom_call.1} parent=1 // pred_check_branch
      %88 = sbr.rel (0) target = $region29
    $region28: #{tpu_custom_call.1} parent=1 // pred_region
      %s90 = ssub.s32 256, 256
      %91 = vsyncadd [#allocation12], %s90
      %s92 = sshll.u32 [#allocation13], 4
      %s93 = int_to_ptr.vmem [resolvable:$true] %s92
      %98 = dma.hbm_to_vmem [thread:$0]  %s6, 256, %s93, [#allocation12], 128, 128, 8
    $region29: #{tpu_custom_call.1} parent=1 // pred_fallthru
      _
    // Predicated region
    $region30: #{tpu_custom_call.1} parent=1 // pred_check
      _
    $region31: #{tpu_custom_call.1} parent=1 // pred_check_branch
      %100 = sbr.rel (0) target = $region33
    $region32: #{tpu_custom_call.1} parent=1 // pred_region
      %101 = dma.done [#allocation3], 1024
    $region33: #{tpu_custom_call.1} parent=1 // pred_fallthru
      _
    // Predicated region
    $region34: #{tpu_custom_call.1} parent=1 // pred_check
      _
    $region35: #{tpu_custom_call.1} parent=1 // pred_check_branch
      %103 = sbr.rel (0) target = $region37
    $region36: #{tpu_custom_call.1} parent=1 // pred_region
      %104 = dma.done [#allocation6], 64
    $region37: #{tpu_custom_call.1} parent=1 // pred_fallthru
      _
    // Predicated region
    $region38: #{tpu_custom_call.1} parent=1 // pred_check
      _
    $region39: #{tpu_custom_call.1} parent=1 // pred_check_branch
      %106 = sbr.rel (0) target = $region41
    $region40: #{tpu_custom_call.1} parent=1 // pred_region
      %107 = dma.done [#allocation6], 64
    $region41: #{tpu_custom_call.1} parent=1 // pred_fallthru
      _
    // Predicated region
    $region42: #{tpu_custom_call.1} parent=1 // pred_check
      _
    $region43: #{tpu_custom_call.1} parent=1 // pred_check_branch
      %109 = sbr.rel (0) target = $region45
    $region44: #{tpu_custom_call.1} parent=1 // pred_region
      %110 = dma.done [#allocation9], 32768
    $region45: #{tpu_custom_call.1} parent=1 // pred_fallthru
      _
    // Predicated region
    $region46: #{tpu_custom_call.1} parent=1 // pred_check
      _
    $region47: #{tpu_custom_call.1} parent=1 // pred_check_branch
      %112 = sbr.rel (0) target = $region49
    $region48: #{tpu_custom_call.1} parent=1 // pred_region
      %113 = dma.done [#allocation9], 128
    $region49: #{tpu_custom_call.1} parent=1 // pred_fallthru
      _
    // Predicated region
    $region50: #{tpu_custom_call.1} parent=1 // pred_check
      _
    $region51: #{tpu_custom_call.1} parent=1 // pred_check_branch
      %115 = sbr.rel (0) target = $region53
    $region52: #{tpu_custom_call.1} parent=1 // pred_region
      %116 = dma.done [#allocation12], 256
    $region53: #{tpu_custom_call.1} parent=1 // pred_fallthru
      _
    // Predicated region
    $region54: #{tpu_custom_call.1} parent=1 // pred_check
      _
    $region55: #{tpu_custom_call.1} parent=1 // pred_check_branch
      %118 = sbr.rel (0) target = $region57
    $region56: #{tpu_custom_call.1} parent=1 // pred_region
      %119 = dma.done [#allocation12], 256
    $region57: #{tpu_custom_call.1} parent=1 // pred_fallthru
      _
    %v120 = vld [vmem:[#allocation2] sm:$0xff]
    %v121 = vld [vmem:[#allocation2 + $0x8] sm:$0xff]
    %v122 = vld [vmem:[#allocation2 + $0x10] sm:$0xff]
    %v123 = vld [vmem:[#allocation2 + $0x18] sm:$0xff]
    %v124 = vld [vmem:[#allocation2 + $0x20] sm:$0xff]
    %v125 = vld [vmem:[#allocation2 + $0x28] sm:$0xff]
    %v126 = vld [vmem:[#allocation2 + $0x30] sm:$0xff]
    %v127 = vld [vmem:[#allocation2 + $0x38] sm:$0xff]
    %v128 = vadd.f32 %v120, %v121
    %v129 = vadd.f32 %v128, %v122
    %v130 = vadd.f32 %v129, %v123
    %131 = vadd.xlane.f32.xlu0 %v130
    %v132 = vpop.xlane.xlu0 %131
    %v133 = vadd.f32 %v124, %v125
    %v134 = vadd.f32 %v133, %v126
    %v135 = vadd.f32 %v134, %v127
    %136 = vadd.xlane.f32.xlu0 %v135
    %v137 = vpop.xlane.xlu0 %136
    %v138 = vrcp.pop 512.0
    %v139 = vmul.f32 %v132, %v138
    %v140 = vmul.f32 %v137, %v138
    %v141 = vsub.f32 %v120, %v139
    %v142 = vsub.f32 %v121, %v139
    %v143 = vsub.f32 %v122, %v139
    %v144 = vsub.f32 %v123, %v139
    %v145 = vsub.f32 %v124, %v140
    %v146 = vsub.f32 %v125, %v140
    %v147 = vsub.f32 %v126, %v140
    %v148 = vsub.f32 %v127, %v140
    %v149 = vmul.f32 %v141, %v141
    %v150 = vmul.f32 %v142, %v142
    %v151 = vmul.f32 %v143, %v143
    %v152 = vmul.f32 %v144, %v144
    %v153 = vmul.f32 %v145, %v145
    %v154 = vmul.f32 %v146, %v146
    %v155 = vmul.f32 %v147, %v147
    %v156 = vmul.f32 %v148, %v148
    %v157 = vadd.f32 %v149, %v150
    %v158 = vadd.f32 %v157, %v151
    %v159 = vadd.f32 %v158, %v152
    %160 = vadd.xlane.f32.xlu0 %v159
    %v161 = vpop.xlane.xlu0 %160
    %v162 = vadd.f32 %v153, %v154
    %v163 = vadd.f32 %v162, %v155
    %v164 = vadd.f32 %v163, %v156
    %165 = vadd.xlane.f32.xlu0 %v164
    %v166 = vpop.xlane.xlu0 %165
    %v167 = vmul.f32 %v161, %v138
    %v168 = vmul.f32 %v166, %v138
    %v169 = vadd.f32 %v167, 1e-05
    %v170 = vadd.f32 %v168, 1e-05
    %v171 = vrsqrt.pop %v169
    %v172 = vrsqrt.pop %v170
    %v173 = vmul.f32 %v141, %v171
    %v174 = vmul.f32 %v142, %v171
    %v175 = vmul.f32 %v143, %v171
    %v176 = vmul.f32 %v144, %v171
    %v177 = vmul.f32 %v145, %v172
    %v178 = vmul.f32 %v146, %v172
    %v179 = vmul.f32 %v147, %v172
    %v180 = vmul.f32 %v148, %v172
    %v181 = vld [vmem:[#allocation5] sm:$0xf]
    %v183 = vlaneseq
    %v184 = vshrl.u32 %v183, 7
    %v185 = vsub.s32 0, %v184
    %v186 = vrot.slane %v181, %v185
    %v187 = vlaneseq
    %v188 = vshrl.u32 %v187, 7
    %v189 = vsub.s32 1, %v188
    %v190 = vrot.slane %v181, %v189
    %v191 = vlaneseq
    %v192 = vshrl.u32 %v191, 7
    %v193 = vsub.s32 2, %v192
    %v194 = vrot.slane %v181, %v193
    %v195 = vlaneseq
    %v196 = vshrl.u32 %v195, 7
    %v197 = vsub.s32 3, %v196
    %v198 = vrot.slane %v181, %v197
    %v203 = vmul.f32 %v173, %v186
    %v204 = vmul.f32 %v174, %v190
    %v205 = vmul.f32 %v175, %v194
    %v206 = vmul.f32 %v176, %v198
    %v207 = vmul.f32 %v177, %v186
    %v208 = vmul.f32 %v178, %v190
    %v209 = vmul.f32 %v179, %v194
    %v210 = vmul.f32 %v180, %v198
    %v211 = vld [vmem:[#allocation7] sm:$0xf]
    %v213 = vlaneseq
    %v214 = vshrl.u32 %v213, 7
    %v215 = vsub.s32 0, %v214
    %v216 = vrot.slane %v211, %v215
    %v217 = vlaneseq
    %v218 = vshrl.u32 %v217, 7
    %v219 = vsub.s32 1, %v218
    %v220 = vrot.slane %v211, %v219
    %v221 = vlaneseq
    %v222 = vshrl.u32 %v221, 7
    %v223 = vsub.s32 2, %v222
    %v224 = vrot.slane %v211, %v223
    %v225 = vlaneseq
    %v226 = vshrl.u32 %v225, 7
    %v227 = vsub.s32 3, %v226
    %v228 = vrot.slane %v211, %v227
    %v233 = vadd.f32 %v203, %v216
    %v234 = vadd.f32 %v204, %v220
    %v235 = vadd.f32 %v205, %v224
    %v236 = vadd.f32 %v206, %v228
    %v237 = vadd.f32 %v207, %v216
    %v238 = vadd.f32 %v208, %v220
    %v239 = vadd.f32 %v209, %v224
    %v240 = vadd.f32 %v210, %v228
    %v241 = vpack.c.bf16 %v237, %v233
    %v242 = vpack.c.bf16 %v238, %v234
    %v243 = vpack.c.bf16 %v239, %v235
    %v244 = vpack.c.bf16 %v240, %v236
    %v245 = vld [vmem:[#allocation8] sm:$0xff]
    %v246 = vld [vmem:[#allocation8 + $0x8] sm:$0xff]
    %v247 = vld [vmem:[#allocation8 + $0x10] sm:$0xff]
    %v248 = vld [vmem:[#allocation8 + $0x18] sm:$0xff]
    %v249 = vld [vmem:[#allocation8 + $0x20] sm:$0xff]
    %v250 = vld [vmem:[#allocation8 + $0x28] sm:$0xff]
    %v251 = vld [vmem:[#allocation8 + $0x30] sm:$0xff]
    %v252 = vld [vmem:[#allocation8 + $0x38] sm:$0xff]
    %v253 = vld [vmem:[#allocation8 + $0x40] sm:$0xff]
    %v254 = vld [vmem:[#allocation8 + $0x48] sm:$0xff]
    %v255 = vld [vmem:[#allocation8 + $0x50] sm:$0xff]
    %v256 = vld [vmem:[#allocation8 + $0x58] sm:$0xff]
    %v257 = vld [vmem:[#allocation8 + $0x60] sm:$0xff]
    %v258 = vld [vmem:[#allocation8 + $0x68] sm:$0xff]
    %v259 = vld [vmem:[#allocation8 + $0x70] sm:$0xff]
    %v260 = vld [vmem:[#allocation8 + $0x78] sm:$0xff]
    %v261 = vld [vmem:[#allocation8 + $0x80] sm:$0xff]
    %v262 = vld [vmem:[#allocation8 + $0x88] sm:$0xff]
    %v263 = vld [vmem:[#allocation8 + $0x90] sm:$0xff]
    %v264 = vld [vmem:[#allocation8 + $0x98] sm:$0xff]
    %v265 = vld [vmem:[#allocation8 + $0xa0] sm:$0xff]
    %v266 = vld [vmem:[#allocation8 + $0xa8] sm:$0xff]
    %v267 = vld [vmem:[#allocation8 + $0xb0] sm:$0xff]
    %v268 = vld [vmem:[#allocation8 + $0xb8] sm:$0xff]
    %v269 = vld [vmem:[#allocation8 + $0xc0] sm:$0xff]
    %v270 = vld [vmem:[#allocation8 + $0xc8] sm:$0xff]
    %v271 = vld [vmem:[#allocation8 + $0xd0] sm:$0xff]
    %v272 = vld [vmem:[#allocation8 + $0xd8] sm:$0xff]
    %v273 = vld [vmem:[#allocation8 + $0xe0] sm:$0xff]
    %v274 = vld [vmem:[#allocation8 + $0xe8] sm:$0xff]
    %v275 = vld [vmem:[#allocation8 + $0xf0] sm:$0xff]
    %v276 = vld [vmem:[#allocation8 + $0xf8] sm:$0xff]
    %v277 = vld [vmem:[#allocation8 + $0x100] sm:$0xff]
    %v278 = vld [vmem:[#allocation8 + $0x108] sm:$0xff]
    %v279 = vld [vmem:[#allocation8 + $0x110] sm:$0xff]
    %v280 = vld [vmem:[#allocation8 + $0x118] sm:$0xff]
    %v281 = vld [vmem:[#allocation8 + $0x120] sm:$0xff]
    %v282 = vld [vmem:[#allocation8 + $0x128] sm:$0xff]
    %v283 = vld [vmem:[#allocation8 + $0x130] sm:$0xff]
    %v284 = vld [vmem:[#allocation8 + $0x138] sm:$0xff]
    %v285 = vld [vmem:[#allocation8 + $0x140] sm:$0xff]
    %v286 = vld [vmem:[#allocation8 + $0x148] sm:$0xff]
    %v287 = vld [vmem:[#allocation8 + $0x150] sm:$0xff]
    %v288 = vld [vmem:[#allocation8 + $0x158] sm:$0xff]
    %v289 = vld [vmem:[#allocation8 + $0x160] sm:$0xff]
    %v290 = vld [vmem:[#allocation8 + $0x168] sm:$0xff]
    %v291 = vld [vmem:[#allocation8 + $0x170] sm:$0xff]
    %v292 = vld [vmem:[#allocation8 + $0x178] sm:$0xff]
    %v293 = vld [vmem:[#allocation8 + $0x180] sm:$0xff]
    %v294 = vld [vmem:[#allocation8 + $0x188] sm:$0xff]
    %v295 = vld [vmem:[#allocation8 + $0x190] sm:$0xff]
    %v296 = vld [vmem:[#allocation8 + $0x198] sm:$0xff]
    %v297 = vld [vmem:[#allocation8 + $0x1a0] sm:$0xff]
    %v298 = vld [vmem:[#allocation8 + $0x1a8] sm:$0xff]
    %v299 = vld [vmem:[#allocation8 + $0x1b0] sm:$0xff]
    %v300 = vld [vmem:[#allocation8 + $0x1b8] sm:$0xff]
    %v301 = vld [vmem:[#allocation8 + $0x1c0] sm:$0xff]
    %v302 = vld [vmem:[#allocation8 + $0x1c8] sm:$0xff]
    %v303 = vld [vmem:[#allocation8 + $0x1d0] sm:$0xff]
    %v304 = vld [vmem:[#allocation8 + $0x1d8] sm:$0xff]
    %v305 = vld [vmem:[#allocation8 + $0x1e0] sm:$0xff]
    %v306 = vld [vmem:[#allocation8 + $0x1e8] sm:$0xff]
    %v307 = vld [vmem:[#allocation8 + $0x1f0] sm:$0xff]
    %v308 = vld [vmem:[#allocation8 + $0x1f8] sm:$0xff]
    %v309 = vld [vmem:[#allocation8 + $0x200] sm:$0xff]
    %v310 = vld [vmem:[#allocation8 + $0x208] sm:$0xff]
    %v311 = vld [vmem:[#allocation8 + $0x210] sm:$0xff]
    %v312 = vld [vmem:[#allocation8 + $0x218] sm:$0xff]
    %v313 = vld [vmem:[#allocation8 + $0x220] sm:$0xff]
    %v314 = vld [vmem:[#allocation8 + $0x228] sm:$0xff]
    %v315 = vld [vmem:[#allocation8 + $0x230] sm:$0xff]
    %v316 = vld [vmem:[#allocation8 + $0x238] sm:$0xff]
    %v317 = vld [vmem:[#allocation8 + $0x240] sm:$0xff]
    %v318 = vld [vmem:[#allocation8 + $0x248] sm:$0xff]
    %v319 = vld [vmem:[#allocation8 + $0x250] sm:$0xff]
    %v320 = vld [vmem:[#allocation8 + $0x258] sm:$0xff]
    %v321 = vld [vmem:[#allocation8 + $0x260] sm:$0xff]
    %v322 = vld [vmem:[#allocation8 + $0x268] sm:$0xff]
    %v323 = vld [vmem:[#allocation8 + $0x270] sm:$0xff]
    %v324 = vld [vmem:[#allocation8 + $0x278] sm:$0xff]
    %v325 = vld [vmem:[#allocation8 + $0x280] sm:$0xff]
    %v326 = vld [vmem:[#allocation8 + $0x288] sm:$0xff]
    %v327 = vld [vmem:[#allocation8 + $0x290] sm:$0xff]
    %v328 = vld [vmem:[#allocation8 + $0x298] sm:$0xff]
    %v329 = vld [vmem:[#allocation8 + $0x2a0] sm:$0xff]
    %v330 = vld [vmem:[#allocation8 + $0x2a8] sm:$0xff]
    %v331 = vld [vmem:[#allocation8 + $0x2b0] sm:$0xff]
    %v332 = vld [vmem:[#allocation8 + $0x2b8] sm:$0xff]
    %v333 = vld [vmem:[#allocation8 + $0x2c0] sm:$0xff]
    %v334 = vld [vmem:[#allocation8 + $0x2c8] sm:$0xff]
    %v335 = vld [vmem:[#allocation8 + $0x2d0] sm:$0xff]
    %v336 = vld [vmem:[#allocation8 + $0x2d8] sm:$0xff]
    %v337 = vld [vmem:[#allocation8 + $0x2e0] sm:$0xff]
    %v338 = vld [vmem:[#allocation8 + $0x2e8] sm:$0xff]
    %v339 = vld [vmem:[#allocation8 + $0x2f0] sm:$0xff]
    %v340 = vld [vmem:[#allocation8 + $0x2f8] sm:$0xff]
    %v341 = vld [vmem:[#allocation8 + $0x300] sm:$0xff]
    %v342 = vld [vmem:[#allocation8 + $0x308] sm:$0xff]
    %v343 = vld [vmem:[#allocation8 + $0x310] sm:$0xff]
    %v344 = vld [vmem:[#allocation8 + $0x318] sm:$0xff]
    %v345 = vld [vmem:[#allocation8 + $0x320] sm:$0xff]
    %v346 = vld [vmem:[#allocation8 + $0x328] sm:$0xff]
    %v347 = vld [vmem:[#allocation8 + $0x330] sm:$0xff]
    %v348 = vld [vmem:[#allocation8 + $0x338] sm:$0xff]
    %v349 = vld [vmem:[#allocation8 + $0x340] sm:$0xff]
    %v350 = vld [vmem:[#allocation8 + $0x348] sm:$0xff]
    %v351 = vld [vmem:[#allocation8 + $0x350] sm:$0xff]
    %v352 = vld [vmem:[#allocation8 + $0x358] sm:$0xff]
    %v353 = vld [vmem:[#allocation8 + $0x360] sm:$0xff]
    %v354 = vld [vmem:[#allocation8 + $0x368] sm:$0xff]
    %v355 = vld [vmem:[#allocation8 + $0x370] sm:$0xff]
    %v356 = vld [vmem:[#allocation8 + $0x378] sm:$0xff]
    %v357 = vld [vmem:[#allocation8 + $0x380] sm:$0xff]
    %v358 = vld [vmem:[#allocation8 + $0x388] sm:$0xff]
    %v359 = vld [vmem:[#allocation8 + $0x390] sm:$0xff]
    %v360 = vld [vmem:[#allocation8 + $0x398] sm:$0xff]
    %v361 = vld [vmem:[#allocation8 + $0x3a0] sm:$0xff]
    %v362 = vld [vmem:[#allocation8 + $0x3a8] sm:$0xff]
    %v363 = vld [vmem:[#allocation8 + $0x3b0] sm:$0xff]
    %v364 = vld [vmem:[#allocation8 + $0x3b8] sm:$0xff]
    %v365 = vld [vmem:[#allocation8 + $0x3c0] sm:$0xff]
    %v366 = vld [vmem:[#allocation8 + $0x3c8] sm:$0xff]
    %v367 = vld [vmem:[#allocation8 + $0x3d0] sm:$0xff]
    %v368 = vld [vmem:[#allocation8 + $0x3d8] sm:$0xff]
    %v369 = vld [vmem:[#allocation8 + $0x3e0] sm:$0xff]
    %v370 = vld [vmem:[#allocation8 + $0x3e8] sm:$0xff]
    %v371 = vld [vmem:[#allocation8 + $0x3f0] sm:$0xff]
    %v372 = vld [vmem:[#allocation8 + $0x3f8] sm:$0xff]
    %v373 = vld [vmem:[#allocation8 + $0x400] sm:$0xff]
    %v374 = vld [vmem:[#allocation8 + $0x408] sm:$0xff]
    %v375 = vld [vmem:[#allocation8 + $0x410] sm:$0xff]
    %v376 = vld [vmem:[#allocation8 + $0x418] sm:$0xff]
    %v377 = vld [vmem:[#allocation8 + $0x420] sm:$0xff]
    %v378 = vld [vmem:[#allocation8 + $0x428] sm:$0xff]
    %v379 = vld [vmem:[#allocation8 + $0x430] sm:$0xff]
    %v380 = vld [vmem:[#allocation8 + $0x438] sm:$0xff]
    %v381 = vld [vmem:[#allocation8 + $0x440] sm:$0xff]
    %v382 = vld [vmem:[#allocation8 + $0x448] sm:$0xff]
    %v383 = vld [vmem:[#allocation8 + $0x450] sm:$0xff]
    %v384 = vld [vmem:[#allocation8 + $0x458] sm:$0xff]
    %v385 = vld [vmem:[#allocation8 + $0x460] sm:$0xff]
    %v386 = vld [vmem:[#allocation8 + $0x468] sm:$0xff]
    %v387 = vld [vmem:[#allocation8 + $0x470] sm:$0xff]
    %v388 = vld [vmem:[#allocation8 + $0x478] sm:$0xff]
    %v389 = vld [vmem:[#allocation8 + $0x480] sm:$0xff]
    %v390 = vld [vmem:[#allocation8 + $0x488] sm:$0xff]
    %v391 = vld [vmem:[#allocation8 + $0x490] sm:$0xff]
    %v392 = vld [vmem:[#allocation8 + $0x498] sm:$0xff]
    %v393 = vld [vmem:[#allocation8 + $0x4a0] sm:$0xff]
    %v394 = vld [vmem:[#allocation8 + $0x4a8] sm:$0xff]
    %v395 = vld [vmem:[#allocation8 + $0x4b0] sm:$0xff]
    %v396 = vld [vmem:[#allocation8 + $0x4b8] sm:$0xff]
    %v397 = vld [vmem:[#allocation8 + $0x4c0] sm:$0xff]
    %v398 = vld [vmem:[#allocation8 + $0x4c8] sm:$0xff]
    %v399 = vld [vmem:[#allocation8 + $0x4d0] sm:$0xff]
    %v400 = vld [vmem:[#allocation8 + $0x4d8] sm:$0xff]
    %v401 = vld [vmem:[#allocation8 + $0x4e0] sm:$0xff]
    %v402 = vld [vmem:[#allocation8 + $0x4e8] sm:$0xff]
    %v403 = vld [vmem:[#allocation8 + $0x4f0] sm:$0xff]
    %v404 = vld [vmem:[#allocation8 + $0x4f8] sm:$0xff]
    %v405 = vld [vmem:[#allocation8 + $0x500] sm:$0xff]
    %v406 = vld [vmem:[#allocation8 + $0x508] sm:$0xff]
    %v407 = vld [vmem:[#allocation8 + $0x510] sm:$0xff]
    %v408 = vld [vmem:[#allocation8 + $0x518] sm:$0xff]
    %v409 = vld [vmem:[#allocation8 + $0x520] sm:$0xff]
    %v410 = vld [vmem:[#allocation8 + $0x528] sm:$0xff]
    %v411 = vld [vmem:[#allocation8 + $0x530] sm:$0xff]
    %v412 = vld [vmem:[#allocation8 + $0x538] sm:$0xff]
    %v413 = vld [vmem:[#allocation8 + $0x540] sm:$0xff]
    %v414 = vld [vmem:[#allocation8 + $0x548] sm:$0xff]
    %v415 = vld [vmem:[#allocation8 + $0x550] sm:$0xff]
    %v416 = vld [vmem:[#allocation8 + $0x558] sm:$0xff]
    %v417 = vld [vmem:[#allocation8 + $0x560] sm:$0xff]
    %v418 = vld [vmem:[#allocation8 + $0x568] sm:$0xff]
    %v419 = vld [vmem:[#allocation8 + $0x570] sm:$0xff]
    %v420 = vld [vmem:[#allocation8 + $0x578] sm:$0xff]
    %v421 = vld [vmem:[#allocation8 + $0x580] sm:$0xff]
    %v422 = vld [vmem:[#allocation8 + $0x588] sm:$0xff]
    %v423 = vld [vmem:[#allocation8 + $0x590] sm:$0xff]
    %v424 = vld [vmem:[#allocation8 + $0x598] sm:$0xff]
    %v425 = vld [vmem:[#allocation8 + $0x5a0] sm:$0xff]
    %v426 = vld [vmem:[#allocation8 + $0x5a8] sm:$0xff]
    %v427 = vld [vmem:[#allocation8 + $0x5b0] sm:$0xff]
    %v428 = vld [vmem:[#allocation8 + $0x5b8] sm:$0xff]
    %v429 = vld [vmem:[#allocation8 + $0x5c0] sm:$0xff]
    %v430 = vld [vmem:[#allocation8 + $0x5c8] sm:$0xff]
    %v431 = vld [vmem:[#allocation8 + $0x5d0] sm:$0xff]
    %v432 = vld [vmem:[#allocation8 + $0x5d8] sm:$0xff]
    %v433 = vld [vmem:[#allocation8 + $0x5e0] sm:$0xff]
    %v434 = vld [vmem:[#allocation8 + $0x5e8] sm:$0xff]
    %v435 = vld [vmem:[#allocation8 + $0x5f0] sm:$0xff]
    %v436 = vld [vmem:[#allocation8 + $0x5f8] sm:$0xff]
    %v437 = vld [vmem:[#allocation8 + $0x600] sm:$0xff]
    %v438 = vld [vmem:[#allocation8 + $0x608] sm:$0xff]
    %v439 = vld [vmem:[#allocation8 + $0x610] sm:$0xff]
    %v440 = vld [vmem:[#allocation8 + $0x618] sm:$0xff]
    %v441 = vld [vmem:[#allocation8 + $0x620] sm:$0xff]
    %v442 = vld [vmem:[#allocation8 + $0x628] sm:$0xff]
    %v443 = vld [vmem:[#allocation8 + $0x630] sm:$0xff]
    %v444 = vld [vmem:[#allocation8 + $0x638] sm:$0xff]
    %v445 = vld [vmem:[#allocation8 + $0x640] sm:$0xff]
    %v446 = vld [vmem:[#allocation8 + $0x648] sm:$0xff]
    %v447 = vld [vmem:[#allocation8 + $0x650] sm:$0xff]
    %v448 = vld [vmem:[#allocation8 + $0x658] sm:$0xff]
    %v449 = vld [vmem:[#allocation8 + $0x660] sm:$0xff]
    %v450 = vld [vmem:[#allocation8 + $0x668] sm:$0xff]
    %v451 = vld [vmem:[#allocation8 + $0x670] sm:$0xff]
    %v452 = vld [vmem:[#allocation8 + $0x678] sm:$0xff]
    %v453 = vld [vmem:[#allocation8 + $0x680] sm:$0xff]
    %v454 = vld [vmem:[#allocation8 + $0x688] sm:$0xff]
    %v455 = vld [vmem:[#allocation8 + $0x690] sm:$0xff]
    %v456 = vld [vmem:[#allocation8 + $0x698] sm:$0xff]
    %v457 = vld [vmem:[#allocation8 + $0x6a0] sm:$0xff]
    %v458 = vld [vmem:[#allocation8 + $0x6a8] sm:$0xff]
    %v459 = vld [vmem:[#allocation8 + $0x6b0] sm:$0xff]
    %v460 = vld [vmem:[#allocation8 + $0x6b8] sm:$0xff]
    %v461 = vld [vmem:[#allocation8 + $0x6c0] sm:$0xff]
    %v462 = vld [vmem:[#allocation8 + $0x6c8] sm:$0xff]
    %v463 = vld [vmem:[#allocation8 + $0x6d0] sm:$0xff]
    %v464 = vld [vmem:[#allocation8 + $0x6d8] sm:$0xff]
    %v465 = vld [vmem:[#allocation8 + $0x6e0] sm:$0xff]
    %v466 = vld [vmem:[#allocation8 + $0x6e8] sm:$0xff]
    %v467 = vld [vmem:[#allocation8 + $0x6f0] sm:$0xff]
    %v468 = vld [vmem:[#allocation8 + $0x6f8] sm:$0xff]
    %v469 = vld [vmem:[#allocation8 + $0x700] sm:$0xff]
    %v470 = vld [vmem:[#allocation8 + $0x708] sm:$0xff]
    %v471 = vld [vmem:[#allocation8 + $0x710] sm:$0xff]
    %v472 = vld [vmem:[#allocation8 + $0x718] sm:$0xff]
    %v473 = vld [vmem:[#allocation8 + $0x720] sm:$0xff]
    %v474 = vld [vmem:[#allocation8 + $0x728] sm:$0xff]
    %v475 = vld [vmem:[#allocation8 + $0x730] sm:$0xff]
    %v476 = vld [vmem:[#allocation8 + $0x738] sm:$0xff]
    %v477 = vld [vmem:[#allocation8 + $0x740] sm:$0xff]
    %v478 = vld [vmem:[#allocation8 + $0x748] sm:$0xff]
    %v479 = vld [vmem:[#allocation8 + $0x750] sm:$0xff]
    %v480 = vld [vmem:[#allocation8 + $0x758] sm:$0xff]
    %v481 = vld [vmem:[#allocation8 + $0x760] sm:$0xff]
    %v482 = vld [vmem:[#allocation8 + $0x768] sm:$0xff]
    %v483 = vld [vmem:[#allocation8 + $0x770] sm:$0xff]
    %v484 = vld [vmem:[#allocation8 + $0x778] sm:$0xff]
    %v485 = vld [vmem:[#allocation8 + $0x780] sm:$0xff]
    %v486 = vld [vmem:[#allocation8 + $0x788] sm:$0xff]
    %v487 = vld [vmem:[#allocation8 + $0x790] sm:$0xff]
    %v488 = vld [vmem:[#allocation8 + $0x798] sm:$0xff]
    %v489 = vld [vmem:[#allocation8 + $0x7a0] sm:$0xff]
    %v490 = vld [vmem:[#allocation8 + $0x7a8] sm:$0xff]
    %v491 = vld [vmem:[#allocation8 + $0x7b0] sm:$0xff]
    %v492 = vld [vmem:[#allocation8 + $0x7b8] sm:$0xff]
    %v493 = vld [vmem:[#allocation8 + $0x7c0] sm:$0xff]
    %v494 = vld [vmem:[#allocation8 + $0x7c8] sm:$0xff]
    %v495 = vld [vmem:[#allocation8 + $0x7d0] sm:$0xff]
    %v496 = vld [vmem:[#allocation8 + $0x7d8] sm:$0xff]
    %v497 = vld [vmem:[#allocation8 + $0x7e0] sm:$0xff]
    %v498 = vld [vmem:[#allocation8 + $0x7e8] sm:$0xff]
    %v499 = vld [vmem:[#allocation8 + $0x7f0] sm:$0xff]
    %v500 = vld [vmem:[#allocation8 + $0x7f8] sm:$0xff]
    %v501 = vld [vmem:[#allocation10] sm:$0xff]
    %v503 = vlaneseq
    %v504 = vshrl.u32 %v503, 7
    %v505 = vsub.s32 0, %v504
    %v506 = vrot.slane %v501, %v505
    %v507 = vlaneseq
    %v508 = vshrl.u32 %v507, 7
    %v509 = vsub.s32 1, %v508
    %v510 = vrot.slane %v501, %v509
    %v511 = vlaneseq
    %v512 = vshrl.u32 %v511, 7
    %v513 = vsub.s32 2, %v512
    %v514 = vrot.slane %v501, %v513
    %v515 = vlaneseq
    %v516 = vshrl.u32 %v515, 7
    %v517 = vsub.s32 3, %v516
    %v518 = vrot.slane %v501, %v517
    %v519 = vlaneseq
    %v520 = vshrl.u32 %v519, 7
    %v521 = vsub.s32 4, %v520
    %v522 = vrot.slane %v501, %v521
    %v523 = vlaneseq
    %v524 = vshrl.u32 %v523, 7
    %v525 = vsub.s32 5, %v524
    %v526 = vrot.slane %v501, %v525
    %v527 = vlaneseq
    %v528 = vshrl.u32 %v527, 7
    %v529 = vsub.s32 6, %v528
    %v530 = vrot.slane %v501, %v529
    %v531 = vlaneseq
    %v532 = vshrl.u32 %v531, 7
    %v533 = vsub.s32 7, %v532
    %v534 = vrot.slane %v501, %v533
    %v799 = vunpack.c.l.b16 %v245
    %v800 = vunpack.c.h.b16 %v245
    %v801 = vunpack.c.l.b16 %v246
    %v802 = vunpack.c.h.b16 %v246
    %v803 = vunpack.c.l.b16 %v247
    %v804 = vunpack.c.h.b16 %v247
    %v805 = vunpack.c.l.b16 %v248
    %v806 = vunpack.c.h.b16 %v248
    %v807 = vunpack.c.l.b16 %v249
    %v808 = vunpack.c.h.b16 %v249
    %v809 = vunpack.c.l.b16 %v250
    %v810 = vunpack.c.h.b16 %v250
    %v811 = vunpack.c.l.b16 %v251
    %v812 = vunpack.c.h.b16 %v251
    %v813 = vunpack.c.l.b16 %v252
    %v814 = vunpack.c.h.b16 %v252
    %v815 = vunpack.c.l.b16 %v253
    %v816 = vunpack.c.h.b16 %v253
    %v817 = vunpack.c.l.b16 %v254
    %v818 = vunpack.c.h.b16 %v254
    %v819 = vunpack.c.l.b16 %v255
    %v820 = vunpack.c.h.b16 %v255
    %v821 = vunpack.c.l.b16 %v256
    %v822 = vunpack.c.h.b16 %v256
    %v823 = vunpack.c.l.b16 %v257
    %v824 = vunpack.c.h.b16 %v257
    %v825 = vunpack.c.l.b16 %v258
    %v826 = vunpack.c.h.b16 %v258
    %v827 = vunpack.c.l.b16 %v259
    %v828 = vunpack.c.h.b16 %v259
    %v829 = vunpack.c.l.b16 %v260
    %v830 = vunpack.c.h.b16 %v260
    %v831 = vunpack.c.l.b16 %v261
    %v832 = vunpack.c.h.b16 %v261
    %v833 = vunpack.c.l.b16 %v262
    %v834 = vunpack.c.h.b16 %v262
    %v835 = vunpack.c.l.b16 %v263
    %v836 = vunpack.c.h.b16 %v263
    %v837 = vunpack.c.l.b16 %v264
    %v838 = vunpack.c.h.b16 %v264
    %v839 = vunpack.c.l.b16 %v265
    %v840 = vunpack.c.h.b16 %v265
    %v841 = vunpack.c.l.b16 %v266
    %v842 = vunpack.c.h.b16 %v266
    %v843 = vunpack.c.l.b16 %v267
    %v844 = vunpack.c.h.b16 %v267
    %v845 = vunpack.c.l.b16 %v268
    %v846 = vunpack.c.h.b16 %v268
    %v847 = vunpack.c.l.b16 %v269
    %v848 = vunpack.c.h.b16 %v269
    %v849 = vunpack.c.l.b16 %v270
    %v850 = vunpack.c.h.b16 %v270
    %v851 = vunpack.c.l.b16 %v271
    %v852 = vunpack.c.h.b16 %v271
    %v853 = vunpack.c.l.b16 %v272
    %v854 = vunpack.c.h.b16 %v272
    %v855 = vunpack.c.l.b16 %v273
    %v856 = vunpack.c.h.b16 %v273
    %v857 = vunpack.c.l.b16 %v274
    %v858 = vunpack.c.h.b16 %v274
    %v859 = vunpack.c.l.b16 %v275
    %v860 = vunpack.c.h.b16 %v275
    %v861 = vunpack.c.l.b16 %v276
    %v862 = vunpack.c.h.b16 %v276
    %v863 = vunpack.c.l.b16 %v277
    %v864 = vunpack.c.h.b16 %v277
    %v865 = vunpack.c.l.b16 %v278
    %v866 = vunpack.c.h.b16 %v278
    %v867 = vunpack.c.l.b16 %v279
    %v868 = vunpack.c.h.b16 %v279
    %v869 = vunpack.c.l.b16 %v280
    %v870 = vunpack.c.h.b16 %v280
    %v871 = vunpack.c.l.b16 %v281
    %v872 = vunpack.c.h.b16 %v281
    %v873 = vunpack.c.l.b16 %v282
    %v874 = vunpack.c.h.b16 %v282
    %v875 = vunpack.c.l.b16 %v283
    %v876 = vunpack.c.h.b16 %v283
    %v877 = vunpack.c.l.b16 %v284
    %v878 = vunpack.c.h.b16 %v284
    %v879 = vunpack.c.l.b16 %v285
    %v880 = vunpack.c.h.b16 %v285
    %v881 = vunpack.c.l.b16 %v286
    %v882 = vunpack.c.h.b16 %v286
    %v883 = vunpack.c.l.b16 %v287
    %v884 = vunpack.c.h.b16 %v287
    %v885 = vunpack.c.l.b16 %v288
    %v886 = vunpack.c.h.b16 %v288
    %v887 = vunpack.c.l.b16 %v289
    %v888 = vunpack.c.h.b16 %v289
    %v889 = vunpack.c.l.b16 %v290
    %v890 = vunpack.c.h.b16 %v290
    %v891 = vunpack.c.l.b16 %v291
    %v892 = vunpack.c.h.b16 %v291
    %v893 = vunpack.c.l.b16 %v292
    %v894 = vunpack.c.h.b16 %v292
    %v895 = vunpack.c.l.b16 %v293
    %v896 = vunpack.c.h.b16 %v293
    %v897 = vunpack.c.l.b16 %v294
    %v898 = vunpack.c.h.b16 %v294
    %v899 = vunpack.c.l.b16 %v295
    %v900 = vunpack.c.h.b16 %v295
    %v901 = vunpack.c.l.b16 %v296
    %v902 = vunpack.c.h.b16 %v296
    %v903 = vunpack.c.l.b16 %v297
    %v904 = vunpack.c.h.b16 %v297
    %v905 = vunpack.c.l.b16 %v298
    %v906 = vunpack.c.h.b16 %v298
    %v907 = vunpack.c.l.b16 %v299
    %v908 = vunpack.c.h.b16 %v299
    %v909 = vunpack.c.l.b16 %v300
    %v910 = vunpack.c.h.b16 %v300
    %v911 = vunpack.c.l.b16 %v301
    %v912 = vunpack.c.h.b16 %v301
    %v913 = vunpack.c.l.b16 %v302
    %v914 = vunpack.c.h.b16 %v302
    %v915 = vunpack.c.l.b16 %v303
    %v916 = vunpack.c.h.b16 %v303
    %v917 = vunpack.c.l.b16 %v304
    %v918 = vunpack.c.h.b16 %v304
    %v919 = vunpack.c.l.b16 %v305
    %v920 = vunpack.c.h.b16 %v305
    %v921 = vunpack.c.l.b16 %v306
    %v922 = vunpack.c.h.b16 %v306
    %v923 = vunpack.c.l.b16 %v307
    %v924 = vunpack.c.h.b16 %v307
    %v925 = vunpack.c.l.b16 %v308
    %v926 = vunpack.c.h.b16 %v308
    %v927 = vunpack.c.l.b16 %v309
    %v928 = vunpack.c.h.b16 %v309
    %v929 = vunpack.c.l.b16 %v310
    %v930 = vunpack.c.h.b16 %v310
    %v931 = vunpack.c.l.b16 %v311
    %v932 = vunpack.c.h.b16 %v311
    %v933 = vunpack.c.l.b16 %v312
    %v934 = vunpack.c.h.b16 %v312
    %v935 = vunpack.c.l.b16 %v313
    %v936 = vunpack.c.h.b16 %v313
    %v937 = vunpack.c.l.b16 %v314
    %v938 = vunpack.c.h.b16 %v314
    %v939 = vunpack.c.l.b16 %v315
    %v940 = vunpack.c.h.b16 %v315
    %v941 = vunpack.c.l.b16 %v316
    %v942 = vunpack.c.h.b16 %v316
    %v943 = vunpack.c.l.b16 %v317
    %v944 = vunpack.c.h.b16 %v317
    %v945 = vunpack.c.l.b16 %v318
    %v946 = vunpack.c.h.b16 %v318
    %v947 = vunpack.c.l.b16 %v319
    %v948 = vunpack.c.h.b16 %v319
    %v949 = vunpack.c.l.b16 %v320
    %v950 = vunpack.c.h.b16 %v320
    %v951 = vunpack.c.l.b16 %v321
    %v952 = vunpack.c.h.b16 %v321
    %v953 = vunpack.c.l.b16 %v322
    %v954 = vunpack.c.h.b16 %v322
    %v955 = vunpack.c.l.b16 %v323
    %v956 = vunpack.c.h.b16 %v323
    %v957 = vunpack.c.l.b16 %v324
    %v958 = vunpack.c.h.b16 %v324
    %v959 = vunpack.c.l.b16 %v325
    %v960 = vunpack.c.h.b16 %v325
    %v961 = vunpack.c.l.b16 %v326
    %v962 = vunpack.c.h.b16 %v326
    %v963 = vunpack.c.l.b16 %v327
    %v964 = vunpack.c.h.b16 %v327
    %v965 = vunpack.c.l.b16 %v328
    %v966 = vunpack.c.h.b16 %v328
    %v967 = vunpack.c.l.b16 %v329
    %v968 = vunpack.c.h.b16 %v329
    %v969 = vunpack.c.l.b16 %v330
    %v970 = vunpack.c.h.b16 %v330
    %v971 = vunpack.c.l.b16 %v331
    %v972 = vunpack.c.h.b16 %v331
    %v973 = vunpack.c.l.b16 %v332
    %v974 = vunpack.c.h.b16 %v332
    %v975 = vunpack.c.l.b16 %v333
    %v976 = vunpack.c.h.b16 %v333
    %v977 = vunpack.c.l.b16 %v334
    %v978 = vunpack.c.h.b16 %v334
    %v979 = vunpack.c.l.b16 %v335
    %v980 = vunpack.c.h.b16 %v335
    %v981 = vunpack.c.l.b16 %v336
    %v982 = vunpack.c.h.b16 %v336
    %v983 = vunpack.c.l.b16 %v337
    %v984 = vunpack.c.h.b16 %v337
    %v985 = vunpack.c.l.b16 %v338
    %v986 = vunpack.c.h.b16 %v338
    %v987 = vunpack.c.l.b16 %v339
    %v988 = vunpack.c.h.b16 %v339
    %v989 = vunpack.c.l.b16 %v340
    %v990 = vunpack.c.h.b16 %v340
    %v991 = vunpack.c.l.b16 %v341
    %v992 = vunpack.c.h.b16 %v341
    %v993 = vunpack.c.l.b16 %v342
    %v994 = vunpack.c.h.b16 %v342
    %v995 = vunpack.c.l.b16 %v343
    %v996 = vunpack.c.h.b16 %v343
    %v997 = vunpack.c.l.b16 %v344
    %v998 = vunpack.c.h.b16 %v344
    %v999 = vunpack.c.l.b16 %v345
    %v1000 = vunpack.c.h.b16 %v345
    %v1001 = vunpack.c.l.b16 %v346
    %v1002 = vunpack.c.h.b16 %v346
    %v1003 = vunpack.c.l.b16 %v347
    %v1004 = vunpack.c.h.b16 %v347
    %v1005 = vunpack.c.l.b16 %v348
    %v1006 = vunpack.c.h.b16 %v348
    %v1007 = vunpack.c.l.b16 %v349
    %v1008 = vunpack.c.h.b16 %v349
    %v1009 = vunpack.c.l.b16 %v350
    %v1010 = vunpack.c.h.b16 %v350
    %v1011 = vunpack.c.l.b16 %v351
    %v1012 = vunpack.c.h.b16 %v351
    %v1013 = vunpack.c.l.b16 %v352
    %v1014 = vunpack.c.h.b16 %v352
    %v1015 = vunpack.c.l.b16 %v353
    %v1016 = vunpack.c.h.b16 %v353
    %v1017 = vunpack.c.l.b16 %v354
    %v1018 = vunpack.c.h.b16 %v354
    %v1019 = vunpack.c.l.b16 %v355
    %v1020 = vunpack.c.h.b16 %v355
    %v1021 = vunpack.c.l.b16 %v356
    %v1022 = vunpack.c.h.b16 %v356
    %v1023 = vunpack.c.l.b16 %v357
    %v1024 = vunpack.c.h.b16 %v357
    %v1025 = vunpack.c.l.b16 %v358
    %v1026 = vunpack.c.h.b16 %v358
    %v1027 = vunpack.c.l.b16 %v359
    %v1028 = vunpack.c.h.b16 %v359
    %v1029 = vunpack.c.l.b16 %v360
    %v1030 = vunpack.c.h.b16 %v360
    %v1031 = vunpack.c.l.b16 %v361
    %v1032 = vunpack.c.h.b16 %v361
    %v1033 = vunpack.c.l.b16 %v362
    %v1034 = vunpack.c.h.b16 %v362
    %v1035 = vunpack.c.l.b16 %v363
    %v1036 = vunpack.c.h.b16 %v363
    %v1037 = vunpack.c.l.b16 %v364
    %v1038 = vunpack.c.h.b16 %v364
    %v1039 = vunpack.c.l.b16 %v365
    %v1040 = vunpack.c.h.b16 %v365
    %v1041 = vunpack.c.l.b16 %v366
    %v1042 = vunpack.c.h.b16 %v366
    %v1043 = vunpack.c.l.b16 %v367
    %v1044 = vunpack.c.h.b16 %v367
    %v1045 = vunpack.c.l.b16 %v368
    %v1046 = vunpack.c.h.b16 %v368
    %v1047 = vunpack.c.l.b16 %v369
    %v1048 = vunpack.c.h.b16 %v369
    %v1049 = vunpack.c.l.b16 %v370
    %v1050 = vunpack.c.h.b16 %v370
    %v1051 = vunpack.c.l.b16 %v371
    %v1052 = vunpack.c.h.b16 %v371
    %v1053 = vunpack.c.l.b16 %v372
    %v1054 = vunpack.c.h.b16 %v372
    %v1055 = vunpack.c.l.b16 %v373
    %v1056 = vunpack.c.h.b16 %v373
    %v1057 = vunpack.c.l.b16 %v374
    %v1058 = vunpack.c.h.b16 %v374
    %v1059 = vunpack.c.l.b16 %v375
    %v1060 = vunpack.c.h.b16 %v375
    %v1061 = vunpack.c.l.b16 %v376
    %v1062 = vunpack.c.h.b16 %v376
    %v1063 = vunpack.c.l.b16 %v377
    %v1064 = vunpack.c.h.b16 %v377
    %v1065 = vunpack.c.l.b16 %v378
    %v1066 = vunpack.c.h.b16 %v378
    %v1067 = vunpack.c.l.b16 %v379
    %v1068 = vunpack.c.h.b16 %v379
    %v1069 = vunpack.c.l.b16 %v380
    %v1070 = vunpack.c.h.b16 %v380
    %v1071 = vunpack.c.l.b16 %v381
    %v1072 = vunpack.c.h.b16 %v381
    %v1073 = vunpack.c.l.b16 %v382
    %v1074 = vunpack.c.h.b16 %v382
    %v1075 = vunpack.c.l.b16 %v383
    %v1076 = vunpack.c.h.b16 %v383
    %v1077 = vunpack.c.l.b16 %v384
    %v1078 = vunpack.c.h.b16 %v384
    %v1079 = vunpack.c.l.b16 %v385
    %v1080 = vunpack.c.h.b16 %v385
    %v1081 = vunpack.c.l.b16 %v386
    %v1082 = vunpack.c.h.b16 %v386
    %v1083 = vunpack.c.l.b16 %v387
    %v1084 = vunpack.c.h.b16 %v387
    %v1085 = vunpack.c.l.b16 %v388
    %v1086 = vunpack.c.h.b16 %v388
    %v1087 = vunpack.c.l.b16 %v389
    %v1088 = vunpack.c.h.b16 %v389
    %v1089 = vunpack.c.l.b16 %v390
    %v1090 = vunpack.c.h.b16 %v390
    %v1091 = vunpack.c.l.b16 %v391
    %v1092 = vunpack.c.h.b16 %v391
    %v1093 = vunpack.c.l.b16 %v392
    %v1094 = vunpack.c.h.b16 %v392
    %v1095 = vunpack.c.l.b16 %v393
    %v1096 = vunpack.c.h.b16 %v393
    %v1097 = vunpack.c.l.b16 %v394
    %v1098 = vunpack.c.h.b16 %v394
    %v1099 = vunpack.c.l.b16 %v395
    %v1100 = vunpack.c.h.b16 %v395
    %v1101 = vunpack.c.l.b16 %v396
    %v1102 = vunpack.c.h.b16 %v396
    %v1103 = vunpack.c.l.b16 %v397
    %v1104 = vunpack.c.h.b16 %v397
    %v1105 = vunpack.c.l.b16 %v398
    %v1106 = vunpack.c.h.b16 %v398
    %v1107 = vunpack.c.l.b16 %v399
    %v1108 = vunpack.c.h.b16 %v399
    %v1109 = vunpack.c.l.b16 %v400
    %v1110 = vunpack.c.h.b16 %v400
    %v1111 = vunpack.c.l.b16 %v401
    %v1112 = vunpack.c.h.b16 %v401
    %v1113 = vunpack.c.l.b16 %v402
    %v1114 = vunpack.c.h.b16 %v402
    %v1115 = vunpack.c.l.b16 %v403
    %v1116 = vunpack.c.h.b16 %v403
    %v1117 = vunpack.c.l.b16 %v404
    %v1118 = vunpack.c.h.b16 %v404
    %v1119 = vunpack.c.l.b16 %v405
    %v1120 = vunpack.c.h.b16 %v405
    %v1121 = vunpack.c.l.b16 %v406
    %v1122 = vunpack.c.h.b16 %v406
    %v1123 = vunpack.c.l.b16 %v407
    %v1124 = vunpack.c.h.b16 %v407
    %v1125 = vunpack.c.l.b16 %v408
    %v1126 = vunpack.c.h.b16 %v408
    %v1127 = vunpack.c.l.b16 %v409
    %v1128 = vunpack.c.h.b16 %v409
    %v1129 = vunpack.c.l.b16 %v410
    %v1130 = vunpack.c.h.b16 %v410
    %v1131 = vunpack.c.l.b16 %v411
    %v1132 = vunpack.c.h.b16 %v411
    %v1133 = vunpack.c.l.b16 %v412
    %v1134 = vunpack.c.h.b16 %v412
    %v1135 = vunpack.c.l.b16 %v413
    %v1136 = vunpack.c.h.b16 %v413
    %v1137 = vunpack.c.l.b16 %v414
    %v1138 = vunpack.c.h.b16 %v414
    %v1139 = vunpack.c.l.b16 %v415
    %v1140 = vunpack.c.h.b16 %v415
    %v1141 = vunpack.c.l.b16 %v416
    %v1142 = vunpack.c.h.b16 %v416
    %v1143 = vunpack.c.l.b16 %v417
    %v1144 = vunpack.c.h.b16 %v417
    %v1145 = vunpack.c.l.b16 %v418
    %v1146 = vunpack.c.h.b16 %v418
    %v1147 = vunpack.c.l.b16 %v419
    %v1148 = vunpack.c.h.b16 %v419
    %v1149 = vunpack.c.l.b16 %v420
    %v1150 = vunpack.c.h.b16 %v420
    %v1151 = vunpack.c.l.b16 %v421
    %v1152 = vunpack.c.h.b16 %v421
    %v1153 = vunpack.c.l.b16 %v422
    %v1154 = vunpack.c.h.b16 %v422
    %v1155 = vunpack.c.l.b16 %v423
    %v1156 = vunpack.c.h.b16 %v423
    %v1157 = vunpack.c.l.b16 %v424
    %v1158 = vunpack.c.h.b16 %v424
    %v1159 = vunpack.c.l.b16 %v425
    %v1160 = vunpack.c.h.b16 %v425
    %v1161 = vunpack.c.l.b16 %v426
    %v1162 = vunpack.c.h.b16 %v426
    %v1163 = vunpack.c.l.b16 %v427
    %v1164 = vunpack.c.h.b16 %v427
    %v1165 = vunpack.c.l.b16 %v428
    %v1166 = vunpack.c.h.b16 %v428
    %v1167 = vunpack.c.l.b16 %v429
    %v1168 = vunpack.c.h.b16 %v429
    %v1169 = vunpack.c.l.b16 %v430
    %v1170 = vunpack.c.h.b16 %v430
    %v1171 = vunpack.c.l.b16 %v431
    %v1172 = vunpack.c.h.b16 %v431
    %v1173 = vunpack.c.l.b16 %v432
    %v1174 = vunpack.c.h.b16 %v432
    %v1175 = vunpack.c.l.b16 %v433
    %v1176 = vunpack.c.h.b16 %v433
    %v1177 = vunpack.c.l.b16 %v434
    %v1178 = vunpack.c.h.b16 %v434
    %v1179 = vunpack.c.l.b16 %v435
    %v1180 = vunpack.c.h.b16 %v435
    %v1181 = vunpack.c.l.b16 %v436
    %v1182 = vunpack.c.h.b16 %v436
    %v1183 = vunpack.c.l.b16 %v437
    %v1184 = vunpack.c.h.b16 %v437
    %v1185 = vunpack.c.l.b16 %v438
    %v1186 = vunpack.c.h.b16 %v438
    %v1187 = vunpack.c.l.b16 %v439
    %v1188 = vunpack.c.h.b16 %v439
    %v1189 = vunpack.c.l.b16 %v440
    %v1190 = vunpack.c.h.b16 %v440
    %v1191 = vunpack.c.l.b16 %v441
    %v1192 = vunpack.c.h.b16 %v441
    %v1193 = vunpack.c.l.b16 %v442
    %v1194 = vunpack.c.h.b16 %v442
    %v1195 = vunpack.c.l.b16 %v443
    %v1196 = vunpack.c.h.b16 %v443
    %v1197 = vunpack.c.l.b16 %v444
    %v1198 = vunpack.c.h.b16 %v444
    %v1199 = vunpack.c.l.b16 %v445
    %v1200 = vunpack.c.h.b16 %v445
    %v1201 = vunpack.c.l.b16 %v446
    %v1202 = vunpack.c.h.b16 %v446
    %v1203 = vunpack.c.l.b16 %v447
    %v1204 = vunpack.c.h.b16 %v447
    %v1205 = vunpack.c.l.b16 %v448
    %v1206 = vunpack.c.h.b16 %v448
    %v1207 = vunpack.c.l.b16 %v449
    %v1208 = vunpack.c.h.b16 %v449
    %v1209 = vunpack.c.l.b16 %v450
    %v1210 = vunpack.c.h.b16 %v450
    %v1211 = vunpack.c.l.b16 %v451
    %v1212 = vunpack.c.h.b16 %v451
    %v1213 = vunpack.c.l.b16 %v452
    %v1214 = vunpack.c.h.b16 %v452
    %v1215 = vunpack.c.l.b16 %v453
    %v1216 = vunpack.c.h.b16 %v453
    %v1217 = vunpack.c.l.b16 %v454
    %v1218 = vunpack.c.h.b16 %v454
    %v1219 = vunpack.c.l.b16 %v455
    %v1220 = vunpack.c.h.b16 %v455
    %v1221 = vunpack.c.l.b16 %v456
    %v1222 = vunpack.c.h.b16 %v456
    %v1223 = vunpack.c.l.b16 %v457
    %v1224 = vunpack.c.h.b16 %v457
    %v1225 = vunpack.c.l.b16 %v458
    %v1226 = vunpack.c.h.b16 %v458
    %v1227 = vunpack.c.l.b16 %v459
    %v1228 = vunpack.c.h.b16 %v459
    %v1229 = vunpack.c.l.b16 %v460
    %v1230 = vunpack.c.h.b16 %v460
    %v1231 = vunpack.c.l.b16 %v461
    %v1232 = vunpack.c.h.b16 %v461
    %v1233 = vunpack.c.l.b16 %v462
    %v1234 = vunpack.c.h.b16 %v462
    %v1235 = vunpack.c.l.b16 %v463
    %v1236 = vunpack.c.h.b16 %v463
    %v1237 = vunpack.c.l.b16 %v464
    %v1238 = vunpack.c.h.b16 %v464
    %v1239 = vunpack.c.l.b16 %v465
    %v1240 = vunpack.c.h.b16 %v465
    %v1241 = vunpack.c.l.b16 %v466
    %v1242 = vunpack.c.h.b16 %v466
    %v1243 = vunpack.c.l.b16 %v467
    %v1244 = vunpack.c.h.b16 %v467
    %v1245 = vunpack.c.l.b16 %v468
    %v1246 = vunpack.c.h.b16 %v468
    %v1247 = vunpack.c.l.b16 %v469
    %v1248 = vunpack.c.h.b16 %v469
    %v1249 = vunpack.c.l.b16 %v470
    %v1250 = vunpack.c.h.b16 %v470
    %v1251 = vunpack.c.l.b16 %v471
    %v1252 = vunpack.c.h.b16 %v471
    %v1253 = vunpack.c.l.b16 %v472
    %v1254 = vunpack.c.h.b16 %v472
    %v1255 = vunpack.c.l.b16 %v473
    %v1256 = vunpack.c.h.b16 %v473
    %v1257 = vunpack.c.l.b16 %v474
    %v1258 = vunpack.c.h.b16 %v474
    %v1259 = vunpack.c.l.b16 %v475
    %v1260 = vunpack.c.h.b16 %v475
    %v1261 = vunpack.c.l.b16 %v476
    %v1262 = vunpack.c.h.b16 %v476
    %v1263 = vunpack.c.l.b16 %v477
    %v1264 = vunpack.c.h.b16 %v477
    %v1265 = vunpack.c.l.b16 %v478
    %v1266 = vunpack.c.h.b16 %v478
    %v1267 = vunpack.c.l.b16 %v479
    %v1268 = vunpack.c.h.b16 %v479
    %v1269 = vunpack.c.l.b16 %v480
    %v1270 = vunpack.c.h.b16 %v480
    %v1271 = vunpack.c.l.b16 %v481
    %v1272 = vunpack.c.h.b16 %v481
    %v1273 = vunpack.c.l.b16 %v482
    %v1274 = vunpack.c.h.b16 %v482
    %v1275 = vunpack.c.l.b16 %v483
    %v1276 = vunpack.c.h.b16 %v483
    %v1277 = vunpack.c.l.b16 %v484
    %v1278 = vunpack.c.h.b16 %v484
    %v1279 = vunpack.c.l.b16 %v485
    %v1280 = vunpack.c.h.b16 %v485
    %v1281 = vunpack.c.l.b16 %v486
    %v1282 = vunpack.c.h.b16 %v486
    %v1283 = vunpack.c.l.b16 %v487
    %v1284 = vunpack.c.h.b16 %v487
    %v1285 = vunpack.c.l.b16 %v488
    %v1286 = vunpack.c.h.b16 %v488
    %v1287 = vunpack.c.l.b16 %v489
    %v1288 = vunpack.c.h.b16 %v489
    %v1289 = vunpack.c.l.b16 %v490
    %v1290 = vunpack.c.h.b16 %v490
    %v1291 = vunpack.c.l.b16 %v491
    %v1292 = vunpack.c.h.b16 %v491
    %v1293 = vunpack.c.l.b16 %v492
    %v1294 = vunpack.c.h.b16 %v492
    %v1295 = vunpack.c.l.b16 %v493
    %v1296 = vunpack.c.h.b16 %v493
    %v1297 = vunpack.c.l.b16 %v494
    %v1298 = vunpack.c.h.b16 %v494
    %v1299 = vunpack.c.l.b16 %v495
    %v1300 = vunpack.c.h.b16 %v495
    %v1301 = vunpack.c.l.b16 %v496
    %v1302 = vunpack.c.h.b16 %v496
    %v1303 = vunpack.c.l.b16 %v497
    %v1304 = vunpack.c.h.b16 %v497
    %v1305 = vunpack.c.l.b16 %v498
    %v1306 = vunpack.c.h.b16 %v498
    %v1307 = vunpack.c.l.b16 %v499
    %v1308 = vunpack.c.h.b16 %v499
    %v1309 = vunpack.c.l.b16 %v500
    %v1310 = vunpack.c.h.b16 %v500
    %v1311 = vpack.c.b16 %v807, %v799
    %v1312 = vpack.c.b16 %v808, %v800
    %v1313 = vpack.c.b16 %v809, %v801
    %v1314 = vpack.c.b16 %v810, %v802
    %v1315 = vpack.c.b16 %v811, %v803
    %v1316 = vpack.c.b16 %v812, %v804
    %v1317 = vpack.c.b16 %v813, %v805
    %v1318 = vpack.c.b16 %v814, %v806
    %v1319 = vpack.c.b16 %v823, %v815
    %v1320 = vpack.c.b16 %v824, %v816
    %v1321 = vpack.c.b16 %v825, %v817
    %v1322 = vpack.c.b16 %v826, %v818
    %v1323 = vpack.c.b16 %v827, %v819
    %v1324 = vpack.c.b16 %v828, %v820
    %v1325 = vpack.c.b16 %v829, %v821
    %v1326 = vpack.c.b16 %v830, %v822
    %v1327 = vpack.c.b16 %v839, %v831
    %v1328 = vpack.c.b16 %v840, %v832
    %v1329 = vpack.c.b16 %v841, %v833
    %v1330 = vpack.c.b16 %v842, %v834
    %v1331 = vpack.c.b16 %v843, %v835
    %v1332 = vpack.c.b16 %v844, %v836
    %v1333 = vpack.c.b16 %v845, %v837
    %v1334 = vpack.c.b16 %v846, %v838
    %v1335 = vpack.c.b16 %v855, %v847
    %v1336 = vpack.c.b16 %v856, %v848
    %v1337 = vpack.c.b16 %v857, %v849
    %v1338 = vpack.c.b16 %v858, %v850
    %v1339 = vpack.c.b16 %v859, %v851
    %v1340 = vpack.c.b16 %v860, %v852
    %v1341 = vpack.c.b16 %v861, %v853
    %v1342 = vpack.c.b16 %v862, %v854
    %v1343 = vpack.c.b16 %v871, %v863
    %v1344 = vpack.c.b16 %v872, %v864
    %v1345 = vpack.c.b16 %v873, %v865
    %v1346 = vpack.c.b16 %v874, %v866
    %v1347 = vpack.c.b16 %v875, %v867
    %v1348 = vpack.c.b16 %v876, %v868
    %v1349 = vpack.c.b16 %v877, %v869
    %v1350 = vpack.c.b16 %v878, %v870
    %v1351 = vpack.c.b16 %v887, %v879
    %v1352 = vpack.c.b16 %v888, %v880
    %v1353 = vpack.c.b16 %v889, %v881
    %v1354 = vpack.c.b16 %v890, %v882
    %v1355 = vpack.c.b16 %v891, %v883
    %v1356 = vpack.c.b16 %v892, %v884
    %v1357 = vpack.c.b16 %v893, %v885
    %v1358 = vpack.c.b16 %v894, %v886
    %v1359 = vpack.c.b16 %v903, %v895
    %v1360 = vpack.c.b16 %v904, %v896
    %v1361 = vpack.c.b16 %v905, %v897
    %v1362 = vpack.c.b16 %v906, %v898
    %v1363 = vpack.c.b16 %v907, %v899
    %v1364 = vpack.c.b16 %v908, %v900
    %v1365 = vpack.c.b16 %v909, %v901
    %v1366 = vpack.c.b16 %v910, %v902
    %v1367 = vpack.c.b16 %v919, %v911
    %v1368 = vpack.c.b16 %v920, %v912
    %v1369 = vpack.c.b16 %v921, %v913
    %v1370 = vpack.c.b16 %v922, %v914
    %v1371 = vpack.c.b16 %v923, %v915
    %v1372 = vpack.c.b16 %v924, %v916
    %v1373 = vpack.c.b16 %v925, %v917
    %v1374 = vpack.c.b16 %v926, %v918
    %v1375 = vpack.c.b16 %v935, %v927
    %v1376 = vpack.c.b16 %v936, %v928
    %v1377 = vpack.c.b16 %v937, %v929
    %v1378 = vpack.c.b16 %v938, %v930
    %v1379 = vpack.c.b16 %v939, %v931
    %v1380 = vpack.c.b16 %v940, %v932
    %v1381 = vpack.c.b16 %v941, %v933
    %v1382 = vpack.c.b16 %v942, %v934
    %v1383 = vpack.c.b16 %v951, %v943
    %v1384 = vpack.c.b16 %v952, %v944
    %v1385 = vpack.c.b16 %v953, %v945
    %v1386 = vpack.c.b16 %v954, %v946
    %v1387 = vpack.c.b16 %v955, %v947
    %v1388 = vpack.c.b16 %v956, %v948
    %v1389 = vpack.c.b16 %v957, %v949
    %v1390 = vpack.c.b16 %v958, %v950
    %v1391 = vpack.c.b16 %v967, %v959
    %v1392 = vpack.c.b16 %v968, %v960
    %v1393 = vpack.c.b16 %v969, %v961
    %v1394 = vpack.c.b16 %v970, %v962
    %v1395 = vpack.c.b16 %v971, %v963
    %v1396 = vpack.c.b16 %v972, %v964
    %v1397 = vpack.c.b16 %v973, %v965
    %v1398 = vpack.c.b16 %v974, %v966
    %v1399 = vpack.c.b16 %v983, %v975
    %v1400 = vpack.c.b16 %v984, %v976
    %v1401 = vpack.c.b16 %v985, %v977
    %v1402 = vpack.c.b16 %v986, %v978
    %v1403 = vpack.c.b16 %v987, %v979
    %v1404 = vpack.c.b16 %v988, %v980
    %v1405 = vpack.c.b16 %v989, %v981
    %v1406 = vpack.c.b16 %v990, %v982
    %v1407 = vpack.c.b16 %v999, %v991
    %v1408 = vpack.c.b16 %v1000, %v992
    %v1409 = vpack.c.b16 %v1001, %v993
    %v1410 = vpack.c.b16 %v1002, %v994
    %v1411 = vpack.c.b16 %v1003, %v995
    %v1412 = vpack.c.b16 %v1004, %v996
    %v1413 = vpack.c.b16 %v1005, %v997
    %v1414 = vpack.c.b16 %v1006, %v998
    %v1415 = vpack.c.b16 %v1015, %v1007
    %v1416 = vpack.c.b16 %v1016, %v1008
    %v1417 = vpack.c.b16 %v1017, %v1009
    %v1418 = vpack.c.b16 %v1018, %v1010
    %v1419 = vpack.c.b16 %v1019, %v1011
    %v1420 = vpack.c.b16 %v1020, %v1012
    %v1421 = vpack.c.b16 %v1021, %v1013
    %v1422 = vpack.c.b16 %v1022, %v1014
    %v1423 = vpack.c.b16 %v1031, %v1023
    %v1424 = vpack.c.b16 %v1032, %v1024
    %v1425 = vpack.c.b16 %v1033, %v1025
    %v1426 = vpack.c.b16 %v1034, %v1026
    %v1427 = vpack.c.b16 %v1035, %v1027
    %v1428 = vpack.c.b16 %v1036, %v1028
    %v1429 = vpack.c.b16 %v1037, %v1029
    %v1430 = vpack.c.b16 %v1038, %v1030
    %v1431 = vpack.c.b16 %v1047, %v1039
    %v1432 = vpack.c.b16 %v1048, %v1040
    %v1433 = vpack.c.b16 %v1049, %v1041
    %v1434 = vpack.c.b16 %v1050, %v1042
    %v1435 = vpack.c.b16 %v1051, %v1043
    %v1436 = vpack.c.b16 %v1052, %v1044
    %v1437 = vpack.c.b16 %v1053, %v1045
    %v1438 = vpack.c.b16 %v1054, %v1046
    %v1439 = vpack.c.b16 %v1063, %v1055
    %v1440 = vpack.c.b16 %v1064, %v1056
    %v1441 = vpack.c.b16 %v1065, %v1057
    %v1442 = vpack.c.b16 %v1066, %v1058
    %v1443 = vpack.c.b16 %v1067, %v1059
    %v1444 = vpack.c.b16 %v1068, %v1060
    %v1445 = vpack.c.b16 %v1069, %v1061
    %v1446 = vpack.c.b16 %v1070, %v1062
    %v1447 = vpack.c.b16 %v1079, %v1071
    %v1448 = vpack.c.b16 %v1080, %v1072
    %v1449 = vpack.c.b16 %v1081, %v1073
    %v1450 = vpack.c.b16 %v1082, %v1074
    %v1451 = vpack.c.b16 %v1083, %v1075
    %v1452 = vpack.c.b16 %v1084, %v1076
    %v1453 = vpack.c.b16 %v1085, %v1077
    %v1454 = vpack.c.b16 %v1086, %v1078
    %v1455 = vpack.c.b16 %v1095, %v1087
    %v1456 = vpack.c.b16 %v1096, %v1088
    %v1457 = vpack.c.b16 %v1097, %v1089
    %v1458 = vpack.c.b16 %v1098, %v1090
    %v1459 = vpack.c.b16 %v1099, %v1091
    %v1460 = vpack.c.b16 %v1100, %v1092
    %v1461 = vpack.c.b16 %v1101, %v1093
    %v1462 = vpack.c.b16 %v1102, %v1094
    %v1463 = vpack.c.b16 %v1111, %v1103
    %v1464 = vpack.c.b16 %v1112, %v1104
    %v1465 = vpack.c.b16 %v1113, %v1105
    %v1466 = vpack.c.b16 %v1114, %v1106
    %v1467 = vpack.c.b16 %v1115, %v1107
    %v1468 = vpack.c.b16 %v1116, %v1108
    %v1469 = vpack.c.b16 %v1117, %v1109
    %v1470 = vpack.c.b16 %v1118, %v1110
    %v1471 = vpack.c.b16 %v1127, %v1119
    %v1472 = vpack.c.b16 %v1128, %v1120
    %v1473 = vpack.c.b16 %v1129, %v1121
    %v1474 = vpack.c.b16 %v1130, %v1122
    %v1475 = vpack.c.b16 %v1131, %v1123
    %v1476 = vpack.c.b16 %v1132, %v1124
    %v1477 = vpack.c.b16 %v1133, %v1125
    %v1478 = vpack.c.b16 %v1134, %v1126
    %v1479 = vpack.c.b16 %v1143, %v1135
    %v1480 = vpack.c.b16 %v1144, %v1136
    %v1481 = vpack.c.b16 %v1145, %v1137
    %v1482 = vpack.c.b16 %v1146, %v1138
    %v1483 = vpack.c.b16 %v1147, %v1139
    %v1484 = vpack.c.b16 %v1148, %v1140
    %v1485 = vpack.c.b16 %v1149, %v1141
    %v1486 = vpack.c.b16 %v1150, %v1142
    %v1487 = vpack.c.b16 %v1159, %v1151
    %v1488 = vpack.c.b16 %v1160, %v1152
    %v1489 = vpack.c.b16 %v1161, %v1153
    %v1490 = vpack.c.b16 %v1162, %v1154
    %v1491 = vpack.c.b16 %v1163, %v1155
    %v1492 = vpack.c.b16 %v1164, %v1156
    %v1493 = vpack.c.b16 %v1165, %v1157
    %v1494 = vpack.c.b16 %v1166, %v1158
    %v1495 = vpack.c.b16 %v1175, %v1167
    %v1496 = vpack.c.b16 %v1176, %v1168
    %v1497 = vpack.c.b16 %v1177, %v1169
    %v1498 = vpack.c.b16 %v1178, %v1170
    %v1499 = vpack.c.b16 %v1179, %v1171
    %v1500 = vpack.c.b16 %v1180, %v1172
    %v1501 = vpack.c.b16 %v1181, %v1173
    %v1502 = vpack.c.b16 %v1182, %v1174
    %v1503 = vpack.c.b16 %v1191, %v1183
    %v1504 = vpack.c.b16 %v1192, %v1184
    %v1505 = vpack.c.b16 %v1193, %v1185
    %v1506 = vpack.c.b16 %v1194, %v1186
    %v1507 = vpack.c.b16 %v1195, %v1187
    %v1508 = vpack.c.b16 %v1196, %v1188
    %v1509 = vpack.c.b16 %v1197, %v1189
    %v1510 = vpack.c.b16 %v1198, %v1190
    %v1511 = vpack.c.b16 %v1207, %v1199
    %v1512 = vpack.c.b16 %v1208, %v1200
    %v1513 = vpack.c.b16 %v1209, %v1201
    %v1514 = vpack.c.b16 %v1210, %v1202
    %v1515 = vpack.c.b16 %v1211, %v1203
    %v1516 = vpack.c.b16 %v1212, %v1204
    %v1517 = vpack.c.b16 %v1213, %v1205
    %v1518 = vpack.c.b16 %v1214, %v1206
    %v1519 = vpack.c.b16 %v1223, %v1215
    %v1520 = vpack.c.b16 %v1224, %v1216
    %v1521 = vpack.c.b16 %v1225, %v1217
    %v1522 = vpack.c.b16 %v1226, %v1218
    %v1523 = vpack.c.b16 %v1227, %v1219
    %v1524 = vpack.c.b16 %v1228, %v1220
    %v1525 = vpack.c.b16 %v1229, %v1221
    %v1526 = vpack.c.b16 %v1230, %v1222
    %v1527 = vpack.c.b16 %v1239, %v1231
    %v1528 = vpack.c.b16 %v1240, %v1232
    %v1529 = vpack.c.b16 %v1241, %v1233
    %v1530 = vpack.c.b16 %v1242, %v1234
    %v1531 = vpack.c.b16 %v1243, %v1235
    %v1532 = vpack.c.b16 %v1244, %v1236
    %v1533 = vpack.c.b16 %v1245, %v1237
    %v1534 = vpack.c.b16 %v1246, %v1238
    %v1535 = vpack.c.b16 %v1255, %v1247
    %v1536 = vpack.c.b16 %v1256, %v1248
    %v1537 = vpack.c.b16 %v1257, %v1249
    %v1538 = vpack.c.b16 %v1258, %v1250
    %v1539 = vpack.c.b16 %v1259, %v1251
    %v1540 = vpack.c.b16 %v1260, %v1252
    %v1541 = vpack.c.b16 %v1261, %v1253
    %v1542 = vpack.c.b16 %v1262, %v1254
    %v1543 = vpack.c.b16 %v1271, %v1263
    %v1544 = vpack.c.b16 %v1272, %v1264
    %v1545 = vpack.c.b16 %v1273, %v1265
    %v1546 = vpack.c.b16 %v1274, %v1266
    %v1547 = vpack.c.b16 %v1275, %v1267
    %v1548 = vpack.c.b16 %v1276, %v1268
    %v1549 = vpack.c.b16 %v1277, %v1269
    %v1550 = vpack.c.b16 %v1278, %v1270
    %v1551 = vpack.c.b16 %v1287, %v1279
    %v1552 = vpack.c.b16 %v1288, %v1280
    %v1553 = vpack.c.b16 %v1289, %v1281
    %v1554 = vpack.c.b16 %v1290, %v1282
    %v1555 = vpack.c.b16 %v1291, %v1283
    %v1556 = vpack.c.b16 %v1292, %v1284
    %v1557 = vpack.c.b16 %v1293, %v1285
    %v1558 = vpack.c.b16 %v1294, %v1286
    %v1559 = vpack.c.b16 %v1303, %v1295
    %v1560 = vpack.c.b16 %v1304, %v1296
    %v1561 = vpack.c.b16 %v1305, %v1297
    %v1562 = vpack.c.b16 %v1306, %v1298
    %v1563 = vpack.c.b16 %v1307, %v1299
    %v1564 = vpack.c.b16 %v1308, %v1300
    %v1565 = vpack.c.b16 %v1309, %v1301
    %v1566 = vpack.c.b16 %v1310, %v1302
    %1823 = vmatprep.subr.bf16.mxu0 %v1368
    %1824 = vmatpush1.bf16.msra.mxu0 %v1367
    %1825 = vmatprep.subr.bf16.mxu0 %v1360
    %1826 = vmatpush1.bf16.msra.mxu0 %v1359
    %1827 = vmatprep.subr.bf16.mxu0 %v1352
    %1828 = vmatpush1.bf16.msra.mxu0 %v1351
    %1829 = vmatprep.subr.bf16.mxu0 %v1344
    %1830 = vmatpush1.bf16.msra.mxu0 %v1343
    %1831 = vmatprep.subr.bf16.mxu0 %v1336
    %1832 = vmatpush1.bf16.msra.mxu0 %v1335
    %1833 = vmatprep.subr.bf16.mxu0 %v1328
    %1834 = vmatpush1.bf16.msra.mxu0 %v1327
    %1835 = vmatprep.subr.bf16.mxu0 %v1320
    %1836 = vmatpush1.bf16.msra.mxu0 %v1319
    %1837 = vmatprep.subr.bf16.mxu0 %v1312
    %1838 = vmatpush1.bf16.msra.mxu0 %v1311
    %1839 = vmatprep.subr.bf16.mxu0 %v1432
    %1840 = vmatpush2.bf16.msra.mxu0 %v1431
    %1841 = vmatprep.subr.bf16.mxu0 %v1424
    %1842 = vmatpush2.bf16.msra.mxu0 %v1423
    %1843 = vmatprep.subr.bf16.mxu0 %v1416
    %1844 = vmatpush2.bf16.msra.mxu0 %v1415
    %1845 = vmatprep.subr.bf16.mxu0 %v1408
    %1846 = vmatpush2.bf16.msra.mxu0 %v1407
    %1847 = vmatprep.subr.bf16.mxu0 %v1400
    %1848 = vmatpush2.bf16.msra.mxu0 %v1399
    %1849 = vmatprep.subr.bf16.mxu0 %v1392
    %1850 = vmatpush2.bf16.msra.mxu0 %v1391
    %1851 = vmatprep.subr.bf16.mxu0 %v1384
    %1852 = vmatpush2.bf16.msra.mxu0 %v1383
    %1853 = vmatprep.subr.bf16.mxu0 %v1376
    %1854 = vmatpush2.bf16.msra.mxu0 %v1375
    %1855 = vmatprep.mubr.bf16.mxu0 %v242
    %1856 = vmatmul.mubr.bf16.gmra.mxu0 %v241
    %v1857 = vpop.f32.mrf.mxu0
    %v1858 = vadd.f32 %v506, %v1857
    %v1859 = vpop.f32.mrf.mxu0
    %v1860 = vadd.f32 %v510, %v1859
    %v1861 = vpop.f32.mrf.mxu0
    %v1862 = vadd.f32 %v506, %v1861
    %v1863 = vpop.f32.mrf.mxu0
    %v1864 = vadd.f32 %v510, %v1863
    %1865 = vdwg.mxu0
    %1866 = vmatprep.subr.bf16.mxu0 %v1496
    %1867 = vmatpush1.bf16.msra.mxu0 %v1495
    %1868 = vmatprep.subr.bf16.mxu0 %v1488
    %1869 = vmatpush1.bf16.msra.mxu0 %v1487
    %1870 = vmatprep.subr.bf16.mxu0 %v1480
    %1871 = vmatpush1.bf16.msra.mxu0 %v1479
    %1872 = vmatprep.subr.bf16.mxu0 %v1472
    %1873 = vmatpush1.bf16.msra.mxu0 %v1471
    %1874 = vmatprep.subr.bf16.mxu0 %v1464
    %1875 = vmatpush1.bf16.msra.mxu0 %v1463
    %1876 = vmatprep.subr.bf16.mxu0 %v1456
    %1877 = vmatpush1.bf16.msra.mxu0 %v1455
    %1878 = vmatprep.subr.bf16.mxu0 %v1448
    %1879 = vmatpush1.bf16.msra.mxu0 %v1447
    %1880 = vmatprep.subr.bf16.mxu0 %v1440
    %1881 = vmatpush1.bf16.msra.mxu0 %v1439
    %1882 = vmatprep.subr.bf16.mxu0 %v1560
    %1883 = vmatpush2.bf16.msra.mxu0 %v1559
    %1884 = vmatprep.subr.bf16.mxu0 %v1552
    %1885 = vmatpush2.bf16.msra.mxu0 %v1551
    %1886 = vmatprep.subr.bf16.mxu0 %v1544
    %1887 = vmatpush2.bf16.msra.mxu0 %v1543
    %1888 = vmatprep.subr.bf16.mxu0 %v1536
    %1889 = vmatpush2.bf16.msra.mxu0 %v1535
    %1890 = vmatprep.subr.bf16.mxu0 %v1528
    %1891 = vmatpush2.bf16.msra.mxu0 %v1527
    %1892 = vmatprep.subr.bf16.mxu0 %v1520
    %1893 = vmatpush2.bf16.msra.mxu0 %v1519
    %1894 = vmatprep.subr.bf16.mxu0 %v1512
    %1895 = vmatpush2.bf16.msra.mxu0 %v1511
    %1896 = vmatprep.subr.bf16.mxu0 %v1504
    %1897 = vmatpush2.bf16.msra.mxu0 %v1503
    %1898 = vmatprep.mubr.bf16.mxu0 %v244
    %1899 = vmatmul.mubr.bf16.gmra.mxu0 %v243
    %v1900 = vpop.f32.mrf.mxu0
    %v1901 = vadd.f32 %v1858, %v1900
    %v1902 = vpop.f32.mrf.mxu0
    %v1903 = vadd.f32 %v1860, %v1902
    %v1904 = vpop.f32.mrf.mxu0
    %v1905 = vadd.f32 %v1862, %v1904
    %v1906 = vpop.f32.mrf.mxu0
    %v1907 = vadd.f32 %v1864, %v1906
    %1908 = vdwg.mxu0
    %1909 = vmatprep.subr.bf16.mxu0 %v1370
    %1910 = vmatpush1.bf16.msra.mxu0 %v1369
    %1911 = vmatprep.subr.bf16.mxu0 %v1362
    %1912 = vmatpush1.bf16.msra.mxu0 %v1361
    %1913 = vmatprep.subr.bf16.mxu0 %v1354
    %1914 = vmatpush1.bf16.msra.mxu0 %v1353
    %1915 = vmatprep.subr.bf16.mxu0 %v1346
    %1916 = vmatpush1.bf16.msra.mxu0 %v1345
    %1917 = vmatprep.subr.bf16.mxu0 %v1338
    %1918 = vmatpush1.bf16.msra.mxu0 %v1337
    %1919 = vmatprep.subr.bf16.mxu0 %v1330
    %1920 = vmatpush1.bf16.msra.mxu0 %v1329
    %1921 = vmatprep.subr.bf16.mxu0 %v1322
    %1922 = vmatpush1.bf16.msra.mxu0 %v1321
    %1923 = vmatprep.subr.bf16.mxu0 %v1314
    %1924 = vmatpush1.bf16.msra.mxu0 %v1313
    %1925 = vmatprep.subr.bf16.mxu0 %v1434
    %1926 = vmatpush2.bf16.msra.mxu0 %v1433
    %1927 = vmatprep.subr.bf16.mxu0 %v1426
    %1928 = vmatpush2.bf16.msra.mxu0 %v1425
    %1929 = vmatprep.subr.bf16.mxu0 %v1418
    %1930 = vmatpush2.bf16.msra.mxu0 %v1417
    %1931 = vmatprep.subr.bf16.mxu0 %v1410
    %1932 = vmatpush2.bf16.msra.mxu0 %v1409
    %1933 = vmatprep.subr.bf16.mxu0 %v1402
    %1934 = vmatpush2.bf16.msra.mxu0 %v1401
    %1935 = vmatprep.subr.bf16.mxu0 %v1394
    %1936 = vmatpush2.bf16.msra.mxu0 %v1393
    %1937 = vmatprep.subr.bf16.mxu0 %v1386
    %1938 = vmatpush2.bf16.msra.mxu0 %v1385
    %1939 = vmatprep.subr.bf16.mxu0 %v1378
    %1940 = vmatpush2.bf16.msra.mxu0 %v1377
    %1941 = vmatprep.mubr.bf16.mxu0 %v242
    %1942 = vmatmul.mubr.bf16.gmra.mxu0 %v241
    %v1943 = vpop.f32.mrf.mxu0
    %v1944 = vadd.f32 %v514, %v1943
    %v1945 = vpop.f32.mrf.mxu0
    %v1946 = vadd.f32 %v518, %v1945
    %v1947 = vpop.f32.mrf.mxu0
    %v1948 = vadd.f32 %v514, %v1947
    %v1949 = vpop.f32.mrf.mxu0
    %v1950 = vadd.f32 %v518, %v1949
    %1951 = vdwg.mxu0
    %1952 = vmatprep.subr.bf16.mxu0 %v1498
    %1953 = vmatpush1.bf16.msra.mxu0 %v1497
    %1954 = vmatprep.subr.bf16.mxu0 %v1490
    %1955 = vmatpush1.bf16.msra.mxu0 %v1489
    %1956 = vmatprep.subr.bf16.mxu0 %v1482
    %1957 = vmatpush1.bf16.msra.mxu0 %v1481
    %1958 = vmatprep.subr.bf16.mxu0 %v1474
    %1959 = vmatpush1.bf16.msra.mxu0 %v1473
    %1960 = vmatprep.subr.bf16.mxu0 %v1466
    %1961 = vmatpush1.bf16.msra.mxu0 %v1465
    %1962 = vmatprep.subr.bf16.mxu0 %v1458
    %1963 = vmatpush1.bf16.msra.mxu0 %v1457
    %1964 = vmatprep.subr.bf16.mxu0 %v1450
    %1965 = vmatpush1.bf16.msra.mxu0 %v1449
    %1966 = vmatprep.subr.bf16.mxu0 %v1442
    %1967 = vmatpush1.bf16.msra.mxu0 %v1441
    %1968 = vmatprep.subr.bf16.mxu0 %v1562
    %1969 = vmatpush2.bf16.msra.mxu0 %v1561
    %1970 = vmatprep.subr.bf16.mxu0 %v1554
    %1971 = vmatpush2.bf16.msra.mxu0 %v1553
    %1972 = vmatprep.subr.bf16.mxu0 %v1546
    %1973 = vmatpush2.bf16.msra.mxu0 %v1545
    %1974 = vmatprep.subr.bf16.mxu0 %v1538
    %1975 = vmatpush2.bf16.msra.mxu0 %v1537
    %1976 = vmatprep.subr.bf16.mxu0 %v1530
    %1977 = vmatpush2.bf16.msra.mxu0 %v1529
    %1978 = vmatprep.subr.bf16.mxu0 %v1522
    %1979 = vmatpush2.bf16.msra.mxu0 %v1521
    %1980 = vmatprep.subr.bf16.mxu0 %v1514
    %1981 = vmatpush2.bf16.msra.mxu0 %v1513
    %1982 = vmatprep.subr.bf16.mxu0 %v1506
    %1983 = vmatpush2.bf16.msra.mxu0 %v1505
    %1984 = vmatprep.mubr.bf16.mxu0 %v244
    %1985 = vmatmul.mubr.bf16.gmra.mxu0 %v243
    %v1986 = vpop.f32.mrf.mxu0
    %v1987 = vadd.f32 %v1944, %v1986
    %v1988 = vpop.f32.mrf.mxu0
    %v1989 = vadd.f32 %v1946, %v1988
    %v1990 = vpop.f32.mrf.mxu0
    %v1991 = vadd.f32 %v1948, %v1990
    %v1992 = vpop.f32.mrf.mxu0
    %v1993 = vadd.f32 %v1950, %v1992
    %1994 = vdwg.mxu0
    %1995 = vmatprep.subr.bf16.mxu0 %v1372
    %1996 = vmatpush1.bf16.msra.mxu0 %v1371
    %1997 = vmatprep.subr.bf16.mxu0 %v1364
    %1998 = vmatpush1.bf16.msra.mxu0 %v1363
    %1999 = vmatprep.subr.bf16.mxu0 %v1356
    %2000 = vmatpush1.bf16.msra.mxu0 %v1355
    %2001 = vmatprep.subr.bf16.mxu0 %v1348
    %2002 = vmatpush1.bf16.msra.mxu0 %v1347
    %2003 = vmatprep.subr.bf16.mxu0 %v1340
    %2004 = vmatpush1.bf16.msra.mxu0 %v1339
    %2005 = vmatprep.subr.bf16.mxu0 %v1332
    %2006 = vmatpush1.bf16.msra.mxu0 %v1331
    %2007 = vmatprep.subr.bf16.mxu0 %v1324
    %2008 = vmatpush1.bf16.msra.mxu0 %v1323
    %2009 = vmatprep.subr.bf16.mxu0 %v1316
    %2010 = vmatpush1.bf16.msra.mxu0 %v1315
    %2011 = vmatprep.subr.bf16.mxu0 %v1436
    %2012 = vmatpush2.bf16.msra.mxu0 %v1435
    %2013 = vmatprep.subr.bf16.mxu0 %v1428
    %2014 = vmatpush2.bf16.msra.mxu0 %v1427
    %2015 = vmatprep.subr.bf16.mxu0 %v1420
    %2016 = vmatpush2.bf16.msra.mxu0 %v1419
    %2017 = vmatprep.subr.bf16.mxu0 %v1412
    %2018 = vmatpush2.bf16.msra.mxu0 %v1411
    %2019 = vmatprep.subr.bf16.mxu0 %v1404
    %2020 = vmatpush2.bf16.msra.mxu0 %v1403
    %2021 = vmatprep.subr.bf16.mxu0 %v1396
    %2022 = vmatpush2.bf16.msra.mxu0 %v1395
    %2023 = vmatprep.subr.bf16.mxu0 %v1388
    %2024 = vmatpush2.bf16.msra.mxu0 %v1387
    %2025 = vmatprep.subr.bf16.mxu0 %v1380
    %2026 = vmatpush2.bf16.msra.mxu0 %v1379
    %2027 = vmatprep.mubr.bf16.mxu0 %v242
    %2028 = vmatmul.mubr.bf16.gmra.mxu0 %v241
    %v2029 = vpop.f32.mrf.mxu0
    %v2030 = vadd.f32 %v522, %v2029
    %v2031 = vpop.f32.mrf.mxu0
    %v2032 = vadd.f32 %v526, %v2031
    %v2033 = vpop.f32.mrf.mxu0
    %v2034 = vadd.f32 %v522, %v2033
    %v2035 = vpop.f32.mrf.mxu0
    %v2036 = vadd.f32 %v526, %v2035
    %2037 = vdwg.mxu0
    %2038 = vmatprep.subr.bf16.mxu0 %v1500
    %2039 = vmatpush1.bf16.msra.mxu0 %v1499
    %2040 = vmatprep.subr.bf16.mxu0 %v1492
    %2041 = vmatpush1.bf16.msra.mxu0 %v1491
    %2042 = vmatprep.subr.bf16.mxu0 %v1484
    %2043 = vmatpush1.bf16.msra.mxu0 %v1483
    %2044 = vmatprep.subr.bf16.mxu0 %v1476
    %2045 = vmatpush1.bf16.msra.mxu0 %v1475
    %2046 = vmatprep.subr.bf16.mxu0 %v1468
    %2047 = vmatpush1.bf16.msra.mxu0 %v1467
    %2048 = vmatprep.subr.bf16.mxu0 %v1460
    %2049 = vmatpush1.bf16.msra.mxu0 %v1459
    %2050 = vmatprep.subr.bf16.mxu0 %v1452
    %2051 = vmatpush1.bf16.msra.mxu0 %v1451
    %2052 = vmatprep.subr.bf16.mxu0 %v1444
    %2053 = vmatpush1.bf16.msra.mxu0 %v1443
    %2054 = vmatprep.subr.bf16.mxu0 %v1564
    %2055 = vmatpush2.bf16.msra.mxu0 %v1563
    %2056 = vmatprep.subr.bf16.mxu0 %v1556
    %2057 = vmatpush2.bf16.msra.mxu0 %v1555
    %2058 = vmatprep.subr.bf16.mxu0 %v1548
    %2059 = vmatpush2.bf16.msra.mxu0 %v1547
    %2060 = vmatprep.subr.bf16.mxu0 %v1540
    %2061 = vmatpush2.bf16.msra.mxu0 %v1539
    %2062 = vmatprep.subr.bf16.mxu0 %v1532
    %2063 = vmatpush2.bf16.msra.mxu0 %v1531
    %2064 = vmatprep.subr.bf16.mxu0 %v1524
    %2065 = vmatpush2.bf16.msra.mxu0 %v1523
    %2066 = vmatprep.subr.bf16.mxu0 %v1516
    %2067 = vmatpush2.bf16.msra.mxu0 %v1515
    %2068 = vmatprep.subr.bf16.mxu0 %v1508
    %2069 = vmatpush2.bf16.msra.mxu0 %v1507
    %2070 = vmatprep.mubr.bf16.mxu0 %v244
    %2071 = vmatmul.mubr.bf16.gmra.mxu0 %v243
    %v2072 = vpop.f32.mrf.mxu0
    %v2073 = vadd.f32 %v2030, %v2072
    %v2074 = vpop.f32.mrf.mxu0
    %v2075 = vadd.f32 %v2032, %v2074
    %v2076 = vpop.f32.mrf.mxu0
    %v2077 = vadd.f32 %v2034, %v2076
    %v2078 = vpop.f32.mrf.mxu0
    %v2079 = vadd.f32 %v2036, %v2078
    %2080 = vdwg.mxu0
    %2081 = vmatprep.subr.bf16.mxu0 %v1374
    %2082 = vmatpush1.bf16.msra.mxu0 %v1373
    %2083 = vmatprep.subr.bf16.mxu0 %v1366
    %2084 = vmatpush1.bf16.msra.mxu0 %v1365
    %2085 = vmatprep.subr.bf16.mxu0 %v1358
    %2086 = vmatpush1.bf16.msra.mxu0 %v1357
    %2087 = vmatprep.subr.bf16.mxu0 %v1350
    %2088 = vmatpush1.bf16.msra.mxu0 %v1349
    %2089 = vmatprep.subr.bf16.mxu0 %v1342
    %2090 = vmatpush1.bf16.msra.mxu0 %v1341
    %2091 = vmatprep.subr.bf16.mxu0 %v1334
    %2092 = vmatpush1.bf16.msra.mxu0 %v1333
    %2093 = vmatprep.subr.bf16.mxu0 %v1326
    %2094 = vmatpush1.bf16.msra.mxu0 %v1325
    %2095 = vmatprep.subr.bf16.mxu0 %v1318
    %2096 = vmatpush1.bf16.msra.mxu0 %v1317
    %2097 = vmatprep.subr.bf16.mxu0 %v1438
    %2098 = vmatpush2.bf16.msra.mxu0 %v1437
    %2099 = vmatprep.subr.bf16.mxu0 %v1430
    %2100 = vmatpush2.bf16.msra.mxu0 %v1429
    %2101 = vmatprep.subr.bf16.mxu0 %v1422
    %2102 = vmatpush2.bf16.msra.mxu0 %v1421
    %2103 = vmatprep.subr.bf16.mxu0 %v1414
    %2104 = vmatpush2.bf16.msra.mxu0 %v1413
    %2105 = vmatprep.subr.bf16.mxu0 %v1406
    %2106 = vmatpush2.bf16.msra.mxu0 %v1405
    %2107 = vmatprep.subr.bf16.mxu0 %v1398
    %2108 = vmatpush2.bf16.msra.mxu0 %v1397
    %2109 = vmatprep.subr.bf16.mxu0 %v1390
    %2110 = vmatpush2.bf16.msra.mxu0 %v1389
    %2111 = vmatprep.subr.bf16.mxu0 %v1382
    %2112 = vmatpush2.bf16.msra.mxu0 %v1381
    %2113 = vmatprep.mubr.bf16.mxu0 %v242
    %2114 = vmatmul.mubr.bf16.gmra.mxu0 %v241
    %v2115 = vpop.f32.mrf.mxu0
    %v2116 = vadd.f32 %v530, %v2115
    %v2117 = vpop.f32.mrf.mxu0
    %v2118 = vadd.f32 %v534, %v2117
    %v2119 = vpop.f32.mrf.mxu0
    %v2120 = vadd.f32 %v530, %v2119
    %v2121 = vpop.f32.mrf.mxu0
    %v2122 = vadd.f32 %v534, %v2121
    %2123 = vdwg.mxu0
    %2124 = vmatprep.subr.bf16.mxu0 %v1502
    %2125 = vmatpush1.bf16.msra.mxu0 %v1501
    %2126 = vmatprep.subr.bf16.mxu0 %v1494
    %2127 = vmatpush1.bf16.msra.mxu0 %v1493
    %2128 = vmatprep.subr.bf16.mxu0 %v1486
    %2129 = vmatpush1.bf16.msra.mxu0 %v1485
    %2130 = vmatprep.subr.bf16.mxu0 %v1478
    %2131 = vmatpush1.bf16.msra.mxu0 %v1477
    %2132 = vmatprep.subr.bf16.mxu0 %v1470
    %2133 = vmatpush1.bf16.msra.mxu0 %v1469
    %2134 = vmatprep.subr.bf16.mxu0 %v1462
    %2135 = vmatpush1.bf16.msra.mxu0 %v1461
    %2136 = vmatprep.subr.bf16.mxu0 %v1454
    %2137 = vmatpush1.bf16.msra.mxu0 %v1453
    %2138 = vmatprep.subr.bf16.mxu0 %v1446
    %2139 = vmatpush1.bf16.msra.mxu0 %v1445
    %2140 = vmatprep.subr.bf16.mxu0 %v1566
    %2141 = vmatpush2.bf16.msra.mxu0 %v1565
    %2142 = vmatprep.subr.bf16.mxu0 %v1558
    %2143 = vmatpush2.bf16.msra.mxu0 %v1557
    %2144 = vmatprep.subr.bf16.mxu0 %v1550
    %2145 = vmatpush2.bf16.msra.mxu0 %v1549
    %2146 = vmatprep.subr.bf16.mxu0 %v1542
    %2147 = vmatpush2.bf16.msra.mxu0 %v1541
    %2148 = vmatprep.subr.bf16.mxu0 %v1534
    %2149 = vmatpush2.bf16.msra.mxu0 %v1533
    %2150 = vmatprep.subr.bf16.mxu0 %v1526
    %2151 = vmatpush2.bf16.msra.mxu0 %v1525
    %2152 = vmatprep.subr.bf16.mxu0 %v1518
    %2153 = vmatpush2.bf16.msra.mxu0 %v1517
    %2154 = vmatprep.subr.bf16.mxu0 %v1510
    %2155 = vmatpush2.bf16.msra.mxu0 %v1509
    %2156 = vmatprep.mubr.bf16.mxu0 %v244
    %2157 = vmatmul.mubr.bf16.gmra.mxu0 %v243
    %v2158 = vpop.f32.mrf.mxu0
    %v2159 = vadd.f32 %v2116, %v2158
    %v2160 = vpop.f32.mrf.mxu0
    %v2161 = vadd.f32 %v2118, %v2160
    %v2162 = vpop.f32.mrf.mxu0
    %v2163 = vadd.f32 %v2120, %v2162
    %v2164 = vpop.f32.mrf.mxu0
    %v2165 = vadd.f32 %v2122, %v2164
    %2166 = vdwg.mxu0
    %v2167 = vld [vmem:[#allocation11] sm:$0xff]
    %v2168 = vld [vmem:[#allocation11 + $0x8] sm:$0xff]
    %v2169 = vld [vmem:[#allocation13] sm:$0xff]
    %v2170 = vld [vmem:[#allocation13 + $0x8] sm:$0xff]
    %v2171 = vmul.f32 %v1901, %v2167
    %v2172 = vmul.f32 %v1905, %v2168
    %2173 = vrot.lane.b32.xlu0 %v1901, 64
    %v2174 = vpop.permute.xlu0 %2173
    %2175 = vrot.lane.b32.xlu0 %v1905, 64
    %v2176 = vpop.permute.xlu0 %2175
    %v2177 = vmul.f32 %v2174, %v2169
    %v2178 = vmul.f32 %v2176, %v2170
    %v2179 = vadd.f32 %v2171, %v2177
    %v2180 = vadd.f32 %v2172, %v2178
    %v2181 = vpack.c.bf16 %v2180, %v2179
    %v2183 = vunpack.c.l.b16 %v2181
    %v2184 = vunpack.c.h.b16 %v2181
    %v2185 = vpack.c.b16 %v2183, %v2183
    %v2186 = vpack.c.b16 %v2184, %v2184
    %2189 = vst [vmem:[#allocation14] sm:$0xf] %v2185
    %2190 = vst [vmem:[#allocation14 + $0x10] sm:$0xf] %v2186
    %v2191 = vmul.f32 %v1903, %v2167
    %v2192 = vmul.f32 %v1907, %v2168
    %2193 = vrot.lane.b32.xlu0 %v1903, 64
    %v2194 = vpop.permute.xlu0 %2193
    %2195 = vrot.lane.b32.xlu0 %v1907, 64
    %v2196 = vpop.permute.xlu0 %2195
    %v2197 = vmul.f32 %v2194, %v2169
    %v2198 = vmul.f32 %v2196, %v2170
    %v2199 = vadd.f32 %v2191, %v2197
    %v2200 = vadd.f32 %v2192, %v2198
    %v2201 = vpack.c.bf16 %v2200, %v2199
    %v2203 = vunpack.c.l.b16 %v2201
    %v2204 = vunpack.c.h.b16 %v2201
    %v2205 = vpack.c.b16 %v2203, %v2203
    %v2206 = vpack.c.b16 %v2204, %v2204
    %2209 = vst [vmem:[#allocation14 + $0x4] sm:$0xf] %v2205
    %2210 = vst [vmem:[#allocation14 + $0x14] sm:$0xf] %v2206
    %v2211 = vmul.f32 %v1987, %v2167
    %v2212 = vmul.f32 %v1991, %v2168
    %2213 = vrot.lane.b32.xlu0 %v1987, 64
    %v2214 = vpop.permute.xlu0 %2213
    %2215 = vrot.lane.b32.xlu0 %v1991, 64
    %v2216 = vpop.permute.xlu0 %2215
    %v2217 = vmul.f32 %v2214, %v2169
    %v2218 = vmul.f32 %v2216, %v2170
    %v2219 = vadd.f32 %v2211, %v2217
    %v2220 = vadd.f32 %v2212, %v2218
    %v2221 = vpack.c.bf16 %v2220, %v2219
    %v2223 = vunpack.c.l.b16 %v2221
    %v2224 = vunpack.c.h.b16 %v2221
    %v2225 = vpack.c.b16 %v2223, %v2223
    %v2226 = vpack.c.b16 %v2224, %v2224
    %2229 = vst [vmem:[#allocation14 + $0x8] sm:$0xf] %v2225
    %2230 = vst [vmem:[#allocation14 + $0x18] sm:$0xf] %v2226
    %v2231 = vmul.f32 %v1989, %v2167
    %v2232 = vmul.f32 %v1993, %v2168
    %2233 = vrot.lane.b32.xlu0 %v1989, 64
    %v2234 = vpop.permute.xlu0 %2233
    %2235 = vrot.lane.b32.xlu0 %v1993, 64
    %v2236 = vpop.permute.xlu0 %2235
    %v2237 = vmul.f32 %v2234, %v2169
    %v2238 = vmul.f32 %v2236, %v2170
    %v2239 = vadd.f32 %v2231, %v2237
    %v2240 = vadd.f32 %v2232, %v2238
    %v2241 = vpack.c.bf16 %v2240, %v2239
    %v2243 = vunpack.c.l.b16 %v2241
    %v2244 = vunpack.c.h.b16 %v2241
    %v2245 = vpack.c.b16 %v2243, %v2243
    %v2246 = vpack.c.b16 %v2244, %v2244
    %2249 = vst [vmem:[#allocation14 + $0xc] sm:$0xf] %v2245
    %2250 = vst [vmem:[#allocation14 + $0x1c] sm:$0xf] %v2246
    %v2251 = vmul.f32 %v2073, %v2167
    %v2252 = vmul.f32 %v2077, %v2168
    %2253 = vrot.lane.b32.xlu0 %v2073, 64
    %v2254 = vpop.permute.xlu0 %2253
    %2255 = vrot.lane.b32.xlu0 %v2077, 64
    %v2256 = vpop.permute.xlu0 %2255
    %v2257 = vmul.f32 %v2254, %v2169
    %v2258 = vmul.f32 %v2256, %v2170
    %v2259 = vadd.f32 %v2251, %v2257
    %v2260 = vadd.f32 %v2252, %v2258
    %v2261 = vpack.c.bf16 %v2260, %v2259
    %v2263 = vunpack.c.l.b16 %v2261
    %v2264 = vunpack.c.h.b16 %v2261
    %v2265 = vpack.c.b16 %v2263, %v2263
    %v2266 = vpack.c.b16 %v2264, %v2264
    %2269 = vst [vmem:[#allocation15] sm:$0xf] %v2265
    %2270 = vst [vmem:[#allocation15 + $0x8] sm:$0xf] %v2266
    %v2271 = vmul.f32 %v2075, %v2167
    %v2272 = vmul.f32 %v2079, %v2168
    %2273 = vrot.lane.b32.xlu0 %v2075, 64
    %v2274 = vpop.permute.xlu0 %2273
    %2275 = vrot.lane.b32.xlu0 %v2079, 64
    %v2276 = vpop.permute.xlu0 %2275
    %v2277 = vmul.f32 %v2274, %v2169
    %v2278 = vmul.f32 %v2276, %v2170
    %v2279 = vadd.f32 %v2271, %v2277
    %v2280 = vadd.f32 %v2272, %v2278
    %v2281 = vpack.c.bf16 %v2280, %v2279
    %v2283 = vunpack.c.l.b16 %v2281
    %v2284 = vunpack.c.h.b16 %v2281
    %v2285 = vpack.c.b16 %v2283, %v2283
    %v2286 = vpack.c.b16 %v2284, %v2284
    %2289 = vst [vmem:[#allocation15 + $0x4] sm:$0xf] %v2285
    %2290 = vst [vmem:[#allocation15 + $0xc] sm:$0xf] %v2286
    %v2291 = vpack.c.bf16 %v2163, %v2159
    %v2292 = vpack.c.bf16 %v2165, %v2161
    %v2295 = vunpack.c.l.b16 %v2291
    %v2296 = vunpack.c.l.b16 %v2292
    %v2297 = vunpack.c.h.b16 %v2291
    %v2298 = vunpack.c.h.b16 %v2292
    %v2299 = vpack.c.b16 %v2296, %v2295
    %v2300 = vpack.c.b16 %v2298, %v2297
    %2303 = vst [vmem:[#allocation17] sm:$0xff] %v2299
    %2304 = vst [vmem:[#allocation17 + $0x8] sm:$0xff] %v2300
    // Predicated region
    $region58: #{tpu_custom_call.1} parent=1 // pred_check
      _
    $region59: #{tpu_custom_call.1} parent=1 // pred_check_branch
      %2306 = sbr.rel (0) target = $region61
    $region60: #{tpu_custom_call.1} parent=1 // pred_region
      %s2308 = ssub.s32 512, 512
      %2309 = vsyncadd [#allocation4], %s2308
      %s2310 = sshll.u32 [#allocation14], 4
      %s2311 = int_to_ptr.vmem [resolvable:$true] %s2310
      %2316 = dma.vmem_to_hbm [thread:$0]  %s2311, 512, %s7, [#allocation4], 256, 256, 16
    $region61: #{tpu_custom_call.1} parent=1 // pred_fallthru
      _
    // Predicated region
    $region62: #{tpu_custom_call.1} parent=1 // pred_check
      _
    $region63: #{tpu_custom_call.1} parent=1 // pred_check_branch
      %2318 = sbr.rel (0) target = $region65
    $region64: #{tpu_custom_call.1} parent=1 // pred_region
      %s2320 = ssub.s32 256, 256
      %2321 = vsyncadd [#allocation16], %s2320
      %s2322 = sshll.u32 [#allocation15], 4
      %s2323 = int_to_ptr.vmem [resolvable:$true] %s2322
      %2328 = dma.vmem_to_hbm [thread:$0]  %s2323, 256, %s8, [#allocation16], 128, 128, 8
    $region65: #{tpu_custom_call.1} parent=1 // pred_fallthru
      _
    // Predicated region
    $region66: #{tpu_custom_call.1} parent=1 // pred_check
      _
    $region67: #{tpu_custom_call.1} parent=1 // pred_check_branch
      %2330 = sbr.rel (0) target = $region69
    $region68: #{tpu_custom_call.1} parent=1 // pred_region
      %s2332 = ssub.s32 256, 256
      %2333 = vsyncadd [#allocation16], %s2332
      %s2334 = sshll.u32 [#allocation17], 4
      %s2335 = int_to_ptr.vmem [resolvable:$true] %s2334
      %2340 = dma.vmem_to_hbm [thread:$0]  %s2335, 256, %s9, [#allocation16], 128, 128, 8
    $region69: #{tpu_custom_call.1} parent=1 // pred_fallthru
      _
    // Predicated region
    $region70: #{tpu_custom_call.1} parent=1 // pred_check
      _
    $region71: #{tpu_custom_call.1} parent=1 // pred_check_branch
      %2342 = sbr.rel (0) target = $region73
    $region72: #{tpu_custom_call.1} parent=1 // pred_region
      %2343 = dma.done [#allocation4], 512
    $region73: #{tpu_custom_call.1} parent=1 // pred_fallthru
      _
    // Predicated region
    $region74: #{tpu_custom_call.1} parent=1 // pred_check
      _
    $region75: #{tpu_custom_call.1} parent=1 // pred_check_branch
      %2345 = sbr.rel (0) target = $region77
    $region76: #{tpu_custom_call.1} parent=1 // pred_region
      %2346 = dma.done [#allocation16], 256
    $region77: #{tpu_custom_call.1} parent=1 // pred_fallthru
      _
    // Predicated region
    $region78: #{tpu_custom_call.1} parent=1 // pred_check
      _
    $region79: #{tpu_custom_call.1} parent=1 // pred_check_branch
      %2348 = sbr.rel (0) target = $region81
    $region80: #{tpu_custom_call.1} parent=1 // pred_region
      %2349 = dma.done [#allocation16], 256
    $region81: #{tpu_custom_call.1} parent=1 // pred_fallthru
      _
    %2350 = vsyncpa [#allocation3], 1
    %2351 = vsyncpa [#allocation6], 1
    %2352 = vsyncpa [#allocation9], 1
    %2353 = vsyncpa [#allocation12], 1
    %2354 = vsyncpa [#allocation4], 1
    %2355 = vsyncpa [#allocation16], 1

</llo_original>
